<compile_context>
chip_gen: v6e
topology: v6e:2x2x1
jax: 0.10.0
libtpu: 0.0.40
codegen_flags: <defaults>
</compile_context>

<pallas_src>
import functools

import jax
import jax.numpy as jnp
from jax.experimental import pallas as pl
from jax.experimental.pallas import tpu as pltpu


# ----------------------------- configuration -----------------------------
BATCH = 2
N_FEATURES = 4
HIDDEN = 32
INPUT_LEN = 8
TARGET_LEN = 8
SEQ_LEN = INPUT_LEN + TARGET_LEN   # total sequence length of X


def _encdec_kernel(x_ref, wih_cat_ref, enc_whh_ref, dec_whh_ref, b_cat_ref,
                   reg_w_ref, reg_b_ref,
                   out_ref,
                   h_scratch,
                   *, input_len, batch, hidden):
    """Encoder LSTM -> decoder LSTM -> regression head, fully unrolled.

    x_ref       : (input_len*B, F)  source_seq, time-major rows (t*B + b)
    wih_cat_ref : (F, 8H)           [W_ih_enc^T | W_ih_dec^T]
    enc_whh_ref : (H, 4H)           W_hh_enc^T
    dec_whh_ref : (H, 4H)           W_hh_dec^T
    b_cat_ref   : (1, 8H)           [b_enc | b_dec]  (b_ih + b_hh folded)
    reg_w_ref   : (H, F)            regression W^T
    reg_b_ref   : (1, F)
    out_ref     : (input_len*B, F)
    h_scratch   : (input_len*B, H)  VMEM scratch for decoder hidden states
    """
    # ---- hoisted input projections + bias for BOTH LSTMs, all timesteps ----
    gates_x = (
        jnp.dot(x_ref[...], wih_cat_ref[...], preferred_element_type=jnp.float32)
        + b_cat_ref[...]
    )  # (T*B, 8H)

    enc_whh = enc_whh_ref[...]
    dec_whh = dec_whh_ref[...]

    def cell(gx, h, c, whh):
        # Recurrent part only: gates_x already holds x@W_ih^T + bias.
        gates = gx + jnp.dot(h, whh, preferred_element_type=jnp.float32)  # (B, 4H)
        # Full-vreg nonlinearities (4H == 128 lanes): 2 EUP pushes, then slice.
        sig = jax.nn.sigmoid(gates)
        th = jnp.tanh(gates)
        i = sig[:, 0 * hidden:1 * hidden]
        f = sig[:, 1 * hidden:2 * hidden]
        g = th[:, 2 * hidden:3 * hidden]
        o = sig[:, 3 * hidden:4 * hidden]
        c_new = f * c + i * g
        h_new = o * jnp.tanh(c_new)
        return h_new, c_new

    h = jnp.zeros((batch, hidden), jnp.float32)
    c = jnp.zeros((batch, hidden), jnp.float32)

    # ---------------- encoder: LSTM over source_seq (unrolled) ----------------
    for t in range(input_len):
        gx = gates_x[t * batch:(t + 1) * batch, 0:4 * hidden]
        h, c = cell(gx, h, c, enc_whh)

    # ------- decoder: LSTM init from encoder final state (unrolled) ----------
    for t in range(input_len):
        gx = gates_x[t * batch:(t + 1) * batch, 4 * hidden:8 * hidden]
        h, c = cell(gx, h, c, dec_whh)
        h_scratch[t * batch:(t + 1) * batch, :] = h   # off the recurrent path

    # ---------- deferred regression head: one matmul + one store -------------
    out_ref[...] = (
        jnp.dot(h_scratch[...], reg_w_ref[...], preferred_element_type=jnp.float32)
        + reg_b_ref[...]
    ).astype(out_ref.dtype)


def encoder_decoder_forward(x, params):
    """x: (B, SEQ_LEN, F) batch-first (PyTorch convention). Returns (B, INPUT_LEN, F)."""
    b, t, f = x.shape
    assert t == SEQ_LEN and f == N_FEATURES

    (enc_wih_t, enc_whh_t, enc_b,
     dec_wih_t, dec_whh_t, dec_b,
     reg_w_t, reg_b) = params

    # source_seq, flattened time-major: row t*B + b  <->  (time t, batch b)
    src = x[:, :INPUT_LEN, :].astype(jnp.float32)
    x_flat = jnp.transpose(src, (1, 0, 2)).reshape(INPUT_LEN * b, f)

    # Concatenate encoder/decoder input weights & biases -> one pre-loop matmul.
    wih_cat = jnp.concatenate([enc_wih_t, dec_wih_t], axis=1)   # (F, 8H)
    b_cat = jnp.concatenate([enc_b, dec_b], axis=1)             # (1, 8H)

    kernel = functools.partial(_encdec_kernel, input_len=INPUT_LEN,
                               batch=b, hidden=HIDDEN)

    vmem = pl.BlockSpec(memory_space=pltpu.MemorySpace.VMEM)

    out_flat = pl.pallas_call(
        kernel,
        out_shape=jax.ShapeDtypeStruct((INPUT_LEN * b, f), jnp.float32),
        in_specs=[vmem] * 7,
        out_specs=vmem,
        scratch_shapes=[pltpu.VMEM((INPUT_LEN * b, HIDDEN), jnp.float32)],
    )(x_flat, wih_cat, enc_whh_t, dec_whh_t, b_cat, reg_w_t, reg_b)

    out = out_flat.reshape(INPUT_LEN, b, f)
    return jnp.transpose(out, (1, 0, 2))    # (B, INPUT_LEN, F)


def make_params(key):
    """Deterministic synthetic LSTM + regression parameters (PyTorch shapes, pre-transposed)."""
    ks = jax.random.split(key, 10)
    s = 0.1
    # encoder LSTM
    enc_wih = s * jax.random.normal(ks[0], (4 * HIDDEN, N_FEATURES), jnp.float32)
    enc_whh = s * jax.random.normal(ks[1], (4 * HIDDEN, HIDDEN), jnp.float32)
    enc_bih = s * jax.random.normal(ks[2], (4 * HIDDEN,), jnp.float32)
    enc_bhh = s * jax.random.normal(ks[3], (4 * HIDDEN,), jnp.float32)
    # decoder LSTM
    dec_wih = s * jax.random.normal(ks[4], (4 * HIDDEN, N_FEATURES), jnp.float32)
    dec_whh = s * jax.random.normal(ks[5], (4 * HIDDEN, HIDDEN), jnp.float32)
    dec_bih = s * jax.random.normal(ks[6], (4 * HIDDEN,), jnp.float32)
    dec_bhh = s * jax.random.normal(ks[7], (4 * HIDDEN,), jnp.float32)
    # regression head (hidden -> n_features)
    reg_w = s * jax.random.normal(ks[8], (N_FEATURES, HIDDEN), jnp.float32)
    reg_b = s * jax.random.normal(ks[9], (N_FEATURES,), jnp.float32)

    return (
        enc_wih.T, enc_whh.T, (enc_bih + enc_bhh)[None, :],
        dec_wih.T, dec_whh.T, (dec_bih + dec_bhh)[None, :],
        reg_w.T, reg_b[None, :],
    )


def reference_forward(x, params):
    """Pure-JAX reference of the same forward pass (for a correctness check)."""
    (enc_wih_t, enc_whh_t, enc_b,
     dec_wih_t, dec_whh_t, dec_b,
     reg_w_t, reg_b) = params
    x = x.astype(jnp.float32)
    b = x.shape[0]

    def step(carry, x_t, wih_t, whh_t, bias):
        h, c = carry
        gates = x_t @ wih_t + h @ whh_t + bias
        i = jax.nn.sigmoid(gates[:, 0 * HIDDEN:1 * HIDDEN])
        f = jax.nn.sigmoid(gates[:, 1 * HIDDEN:2 * HIDDEN])
        g = jnp.tanh(gates[:, 2 * HIDDEN:3 * HIDDEN])
        o = jax.nn.sigmoid(gates[:, 3 * HIDDEN:4 * HIDDEN])
        c = f * c + i * g
        h = o * jnp.tanh(c)
        return h, c

    h = jnp.zeros((b, HIDDEN), jnp.float32)
    c = jnp.zeros((b, HIDDEN), jnp.float32)
    for t in range(INPUT_LEN):
        h, c = step((h, c), x[:, t, :], enc_wih_t, enc_whh_t, enc_b)

    outs = []
    for t in range(INPUT_LEN):
        h, c = step((h, c), x[:, t, :], dec_wih_t, dec_whh_t, dec_b)
        outs.append(h @ reg_w_t + reg_b)
    return jnp.stack(outs, axis=1)


if __name__ == "__main__":
    key = jax.random.PRNGKey(0)
    k_x, k_p = jax.random.split(key)

    x = jax.random.normal(k_x, (BATCH, SEQ_LEN, N_FEATURES), jnp.float32)
    params = make_params(k_p)

    out = encoder_decoder_forward(x, params)
    out = jax.block_until_ready(out)

    ref = reference_forward(x, params)
    assert out.shape == (BATCH, INPUT_LEN, N_FEATURES)
    assert jnp.allclose(out, ref, atol=1e-5, rtol=1e-5), "mismatch vs reference"

    print("KERNEL_OK")
</pallas_src>

<mosaic_0001>
module attributes {stable_mosaic.version = 11 : i64} {
  func.func @_encdec_kernel(%arg0: memref<16x4xf32, #tpu.memory_space<vmem>>, %arg1: memref<4x256xf32, #tpu.memory_space<vmem>>, %arg2: memref<32x128xf32, #tpu.memory_space<vmem>>, %arg3: memref<32x128xf32, #tpu.memory_space<vmem>>, %arg4: memref<1x256xf32, #tpu.memory_space<vmem>>, %arg5: memref<32x4xf32, #tpu.memory_space<vmem>>, %arg6: memref<1x4xf32, #tpu.memory_space<vmem>>, %arg7: memref<16x4xf32, #tpu.memory_space<vmem>>, %arg8: memref<16x32xf32, #tpu.memory_space<vmem>>) attributes {dimension_semantics = [], scalar_prefetch = 0 : i64, scratch_operands = 1 : i64, tpu.core_type = #tpu.core_type<tc>} {
    %c0 = arith.constant 0 : index
    %c0_0 = arith.constant 0 : index
    %0 = vector.load %arg0[%c0, %c0_0] : memref<16x4xf32, #tpu.memory_space<vmem>>, vector<16x4xf32>
    %c0_1 = arith.constant 0 : index
    %c0_2 = arith.constant 0 : index
    %1 = vector.load %arg1[%c0_1, %c0_2] : memref<4x256xf32, #tpu.memory_space<vmem>>, vector<4x256xf32>
    %cst = arith.constant dense<0.000000e+00> : vector<16x256xf32>
    %2 = tpu.matmul %0, %1, %cst {dimension_numbers = #tpu.dot_dimension_numbers<[1], [0], [0], [1], [0, 0, 1, 1], [], []>} : vector<16x4xf32>, vector<4x256xf32>, vector<16x256xf32> -> vector<16x256xf32>
    %c0_3 = arith.constant 0 : index
    %c0_4 = arith.constant 0 : index
    %3 = vector.load %arg4[%c0_3, %c0_4] : memref<1x256xf32, #tpu.memory_space<vmem>>, vector<1x256xf32>
    %4 = vector.broadcast %3 : vector<1x256xf32> to vector<16x256xf32>
    %5 = arith.addf %2, %4 : vector<16x256xf32>
    %c0_5 = arith.constant 0 : index
    %c0_6 = arith.constant 0 : index
    %6 = vector.load %arg2[%c0_5, %c0_6] : memref<32x128xf32, #tpu.memory_space<vmem>>, vector<32x128xf32>
    %c0_7 = arith.constant 0 : index
    %c0_8 = arith.constant 0 : index
    %7 = vector.load %arg3[%c0_7, %c0_8] : memref<32x128xf32, #tpu.memory_space<vmem>>, vector<32x128xf32>
    %cst_9 = arith.constant 0.000000e+00 : f32
    %8 = vector.broadcast %cst_9 : f32 to vector<2x32xf32>
    %cst_10 = arith.constant 0.000000e+00 : f32
    %9 = vector.broadcast %cst_10 : f32 to vector<2x32xf32>
    %10 = vector.extract_strided_slice %5 {offsets = [0, 0], sizes = [2, 128], strides = [1, 1]} : vector<16x256xf32> to vector<2x128xf32>
    %cst_11 = arith.constant dense<0.000000e+00> : vector<2x128xf32>
    %11 = tpu.matmul %8, %6, %cst_11 {dimension_numbers = #tpu.dot_dimension_numbers<[1], [0], [0], [1], [0, 0, 1, 1], [], []>} : vector<2x32xf32>, vector<32x128xf32>, vector<2x128xf32> -> vector<2x128xf32>
    %12 = arith.addf %10, %11 : vector<2x128xf32>
    %13 = arith.negf %12 : vector<2x128xf32>
    %14 = math.exp %13 : vector<2x128xf32>
    %cst_12 = arith.constant 1.000000e+00 : f32
    %15 = vector.broadcast %cst_12 : f32 to vector<2x128xf32>
    %16 = arith.addf %15, %14 : vector<2x128xf32>
    %17 = arith.divf %15, %16 : vector<2x128xf32>
    %18 = math.tanh %12 : vector<2x128xf32>
    %19 = vector.extract_strided_slice %17 {offsets = [0, 0], sizes = [2, 32], strides = [1, 1]} : vector<2x128xf32> to vector<2x32xf32>
    %20 = vector.extract_strided_slice %17 {offsets = [0, 32], sizes = [2, 32], strides = [1, 1]} : vector<2x128xf32> to vector<2x32xf32>
    %21 = vector.extract_strided_slice %18 {offsets = [0, 64], sizes = [2, 32], strides = [1, 1]} : vector<2x128xf32> to vector<2x32xf32>
    %22 = vector.extract_strided_slice %17 {offsets = [0, 96], sizes = [2, 32], strides = [1, 1]} : vector<2x128xf32> to vector<2x32xf32>
    %23 = arith.mulf %20, %9 : vector<2x32xf32>
    %24 = arith.mulf %19, %21 : vector<2x32xf32>
    %25 = arith.addf %23, %24 : vector<2x32xf32>
    %26 = math.tanh %25 : vector<2x32xf32>
    %27 = arith.mulf %22, %26 : vector<2x32xf32>
    %28 = vector.extract_strided_slice %5 {offsets = [2, 0], sizes = [2, 128], strides = [1, 1]} : vector<16x256xf32> to vector<2x128xf32>
    %cst_13 = arith.constant dense<0.000000e+00> : vector<2x128xf32>
    %29 = tpu.matmul %27, %6, %cst_13 {dimension_numbers = #tpu.dot_dimension_numbers<[1], [0], [0], [1], [0, 0, 1, 1], [], []>} : vector<2x32xf32>, vector<32x128xf32>, vector<2x128xf32> -> vector<2x128xf32>
    %30 = arith.addf %28, %29 : vector<2x128xf32>
    %31 = arith.negf %30 : vector<2x128xf32>
    %32 = math.exp %31 : vector<2x128xf32>
    %cst_14 = arith.constant 1.000000e+00 : f32
    %33 = vector.broadcast %cst_14 : f32 to vector<2x128xf32>
    %34 = arith.addf %33, %32 : vector<2x128xf32>
    %35 = arith.divf %33, %34 : vector<2x128xf32>
    %36 = math.tanh %30 : vector<2x128xf32>
    %37 = vector.extract_strided_slice %35 {offsets = [0, 0], sizes = [2, 32], strides = [1, 1]} : vector<2x128xf32> to vector<2x32xf32>
    %38 = vector.extract_strided_slice %35 {offsets = [0, 32], sizes = [2, 32], strides = [1, 1]} : vector<2x128xf32> to vector<2x32xf32>
    %39 = vector.extract_strided_slice %36 {offsets = [0, 64], sizes = [2, 32], strides = [1, 1]} : vector<2x128xf32> to vector<2x32xf32>
    %40 = vector.extract_strided_slice %35 {offsets = [0, 96], sizes = [2, 32], strides = [1, 1]} : vector<2x128xf32> to vector<2x32xf32>
    %41 = arith.mulf %38, %25 : vector<2x32xf32>
    %42 = arith.mulf %37, %39 : vector<2x32xf32>
    %43 = arith.addf %41, %42 : vector<2x32xf32>
    %44 = math.tanh %43 : vector<2x32xf32>
    %45 = arith.mulf %40, %44 : vector<2x32xf32>
    %46 = vector.extract_strided_slice %5 {offsets = [4, 0], sizes = [2, 128], strides = [1, 1]} : vector<16x256xf32> to vector<2x128xf32>
    %cst_15 = arith.constant dense<0.000000e+00> : vector<2x128xf32>
    %47 = tpu.matmul %45, %6, %cst_15 {dimension_numbers = #tpu.dot_dimension_numbers<[1], [0], [0], [1], [0, 0, 1, 1], [], []>} : vector<2x32xf32>, vector<32x128xf32>, vector<2x128xf32> -> vector<2x128xf32>
    %48 = arith.addf %46, %47 : vector<2x128xf32>
    %49 = arith.negf %48 : vector<2x128xf32>
    %50 = math.exp %49 : vector<2x128xf32>
    %cst_16 = arith.constant 1.000000e+00 : f32
    %51 = vector.broadcast %cst_16 : f32 to vector<2x128xf32>
    %52 = arith.addf %51, %50 : vector<2x128xf32>
    %53 = arith.divf %51, %52 : vector<2x128xf32>
    %54 = math.tanh %48 : vector<2x128xf32>
    %55 = vector.extract_strided_slice %53 {offsets = [0, 0], sizes = [2, 32], strides = [1, 1]} : vector<2x128xf32> to vector<2x32xf32>
    %56 = vector.extract_strided_slice %53 {offsets = [0, 32], sizes = [2, 32], strides = [1, 1]} : vector<2x128xf32> to vector<2x32xf32>
    %57 = vector.extract_strided_slice %54 {offsets = [0, 64], sizes = [2, 32], strides = [1, 1]} : vector<2x128xf32> to vector<2x32xf32>
    %58 = vector.extract_strided_slice %53 {offsets = [0, 96], sizes = [2, 32], strides = [1, 1]} : vector<2x128xf32> to vector<2x32xf32>
    %59 = arith.mulf %56, %43 : vector<2x32xf32>
    %60 = arith.mulf %55, %57 : vector<2x32xf32>
    %61 = arith.addf %59, %60 : vector<2x32xf32>
    %62 = math.tanh %61 : vector<2x32xf32>
    %63 = arith.mulf %58, %62 : vector<2x32xf32>
    %64 = vector.extract_strided_slice %5 {offsets = [6, 0], sizes = [2, 128], strides = [1, 1]} : vector<16x256xf32> to vector<2x128xf32>
    %cst_17 = arith.constant dense<0.000000e+00> : vector<2x128xf32>
    %65 = tpu.matmul %63, %6, %cst_17 {dimension_numbers = #tpu.dot_dimension_numbers<[1], [0], [0], [1], [0, 0, 1, 1], [], []>} : vector<2x32xf32>, vector<32x128xf32>, vector<2x128xf32> -> vector<2x128xf32>
    %66 = arith.addf %64, %65 : vector<2x128xf32>
    %67 = arith.negf %66 : vector<2x128xf32>
    %68 = math.exp %67 : vector<2x128xf32>
    %cst_18 = arith.constant 1.000000e+00 : f32
    %69 = vector.broadcast %cst_18 : f32 to vector<2x128xf32>
    %70 = arith.addf %69, %68 : vector<2x128xf32>
    %71 = arith.divf %69, %70 : vector<2x128xf32>
    %72 = math.tanh %66 : vector<2x128xf32>
    %73 = vector.extract_strided_slice %71 {offsets = [0, 0], sizes = [2, 32], strides = [1, 1]} : vector<2x128xf32> to vector<2x32xf32>
    %74 = vector.extract_strided_slice %71 {offsets = [0, 32], sizes = [2, 32], strides = [1, 1]} : vector<2x128xf32> to vector<2x32xf32>
    %75 = vector.extract_strided_slice %72 {offsets = [0, 64], sizes = [2, 32], strides = [1, 1]} : vector<2x128xf32> to vector<2x32xf32>
    %76 = vector.extract_strided_slice %71 {offsets = [0, 96], sizes = [2, 32], strides = [1, 1]} : vector<2x128xf32> to vector<2x32xf32>
    %77 = arith.mulf %74, %61 : vector<2x32xf32>
    %78 = arith.mulf %73, %75 : vector<2x32xf32>
    %79 = arith.addf %77, %78 : vector<2x32xf32>
    %80 = math.tanh %79 : vector<2x32xf32>
    %81 = arith.mulf %76, %80 : vector<2x32xf32>
    %82 = vector.extract_strided_slice %5 {offsets = [8, 0], sizes = [2, 128], strides = [1, 1]} : vector<16x256xf32> to vector<2x128xf32>
    %cst_19 = arith.constant dense<0.000000e+00> : vector<2x128xf32>
    %83 = tpu.matmul %81, %6, %cst_19 {dimension_numbers = #tpu.dot_dimension_numbers<[1], [0], [0], [1], [0, 0, 1, 1], [], []>} : vector<2x32xf32>, vector<32x128xf32>, vector<2x128xf32> -> vector<2x128xf32>
    %84 = arith.addf %82, %83 : vector<2x128xf32>
    %85 = arith.negf %84 : vector<2x128xf32>
    %86 = math.exp %85 : vector<2x128xf32>
    %cst_20 = arith.constant 1.000000e+00 : f32
    %87 = vector.broadcast %cst_20 : f32 to vector<2x128xf32>
    %88 = arith.addf %87, %86 : vector<2x128xf32>
    %89 = arith.divf %87, %88 : vector<2x128xf32>
    %90 = math.tanh %84 : vector<2x128xf32>
    %91 = vector.extract_strided_slice %89 {offsets = [0, 0], sizes = [2, 32], strides = [1, 1]} : vector<2x128xf32> to vector<2x32xf32>
    %92 = vector.extract_strided_slice %89 {offsets = [0, 32], sizes = [2, 32], strides = [1, 1]} : vector<2x128xf32> to vector<2x32xf32>
    %93 = vector.extract_strided_slice %90 {offsets = [0, 64], sizes = [2, 32], strides = [1, 1]} : vector<2x128xf32> to vector<2x32xf32>
    %94 = vector.extract_strided_slice %89 {offsets = [0, 96], sizes = [2, 32], strides = [1, 1]} : vector<2x128xf32> to vector<2x32xf32>
    %95 = arith.mulf %92, %79 : vector<2x32xf32>
    %96 = arith.mulf %91, %93 : vector<2x32xf32>
    %97 = arith.addf %95, %96 : vector<2x32xf32>
    %98 = math.tanh %97 : vector<2x32xf32>
    %99 = arith.mulf %94, %98 : vector<2x32xf32>
    %100 = vector.extract_strided_slice %5 {offsets = [10, 0], sizes = [2, 128], strides = [1, 1]} : vector<16x256xf32> to vector<2x128xf32>
    %cst_21 = arith.constant dense<0.000000e+00> : vector<2x128xf32>
    %101 = tpu.matmul %99, %6, %cst_21 {dimension_numbers = #tpu.dot_dimension_numbers<[1], [0], [0], [1], [0, 0, 1, 1], [], []>} : vector<2x32xf32>, vector<32x128xf32>, vector<2x128xf32> -> vector<2x128xf32>
    %102 = arith.addf %100, %101 : vector<2x128xf32>
    %103 = arith.negf %102 : vector<2x128xf32>
    %104 = math.exp %103 : vector<2x128xf32>
    %cst_22 = arith.constant 1.000000e+00 : f32
    %105 = vector.broadcast %cst_22 : f32 to vector<2x128xf32>
    %106 = arith.addf %105, %104 : vector<2x128xf32>
    %107 = arith.divf %105, %106 : vector<2x128xf32>
    %108 = math.tanh %102 : vector<2x128xf32>
    %109 = vector.extract_strided_slice %107 {offsets = [0, 0], sizes = [2, 32], strides = [1, 1]} : vector<2x128xf32> to vector<2x32xf32>
    %110 = vector.extract_strided_slice %107 {offsets = [0, 32], sizes = [2, 32], strides = [1, 1]} : vector<2x128xf32> to vector<2x32xf32>
    %111 = vector.extract_strided_slice %108 {offsets = [0, 64], sizes = [2, 32], strides = [1, 1]} : vector<2x128xf32> to vector<2x32xf32>
    %112 = vector.extract_strided_slice %107 {offsets = [0, 96], sizes = [2, 32], strides = [1, 1]} : vector<2x128xf32> to vector<2x32xf32>
    %113 = arith.mulf %110, %97 : vector<2x32xf32>
    %114 = arith.mulf %109, %111 : vector<2x32xf32>
    %115 = arith.addf %113, %114 : vector<2x32xf32>
    %116 = math.tanh %115 : vector<2x32xf32>
    %117 = arith.mulf %112, %116 : vector<2x32xf32>
    %118 = vector.extract_strided_slice %5 {offsets = [12, 0], sizes = [2, 128], strides = [1, 1]} : vector<16x256xf32> to vector<2x128xf32>
    %cst_23 = arith.constant dense<0.000000e+00> : vector<2x128xf32>
    %119 = tpu.matmul %117, %6, %cst_23 {dimension_numbers = #tpu.dot_dimension_numbers<[1], [0], [0], [1], [0, 0, 1, 1], [], []>} : vector<2x32xf32>, vector<32x128xf32>, vector<2x128xf32> -> vector<2x128xf32>
    %120 = arith.addf %118, %119 : vector<2x128xf32>
    %121 = arith.negf %120 : vector<2x128xf32>
    %122 = math.exp %121 : vector<2x128xf32>
    %cst_24 = arith.constant 1.000000e+00 : f32
    %123 = vector.broadcast %cst_24 : f32 to vector<2x128xf32>
    %124 = arith.addf %123, %122 : vector<2x128xf32>
    %125 = arith.divf %123, %124 : vector<2x128xf32>
    %126 = math.tanh %120 : vector<2x128xf32>
    %127 = vector.extract_strided_slice %125 {offsets = [0, 0], sizes = [2, 32], strides = [1, 1]} : vector<2x128xf32> to vector<2x32xf32>
    %128 = vector.extract_strided_slice %125 {offsets = [0, 32], sizes = [2, 32], strides = [1, 1]} : vector<2x128xf32> to vector<2x32xf32>
    %129 = vector.extract_strided_slice %126 {offsets = [0, 64], sizes = [2, 32], strides = [1, 1]} : vector<2x128xf32> to vector<2x32xf32>
    %130 = vector.extract_strided_slice %125 {offsets = [0, 96], sizes = [2, 32], strides = [1, 1]} : vector<2x128xf32> to vector<2x32xf32>
    %131 = arith.mulf %128, %115 : vector<2x32xf32>
    %132 = arith.mulf %127, %129 : vector<2x32xf32>
    %133 = arith.addf %131, %132 : vector<2x32xf32>
    %134 = math.tanh %133 : vector<2x32xf32>
    %135 = arith.mulf %130, %134 : vector<2x32xf32>
    %136 = vector.extract_strided_slice %5 {offsets = [14, 0], sizes = [2, 128], strides = [1, 1]} : vector<16x256xf32> to vector<2x128xf32>
    %cst_25 = arith.constant dense<0.000000e+00> : vector<2x128xf32>
    %137 = tpu.matmul %135, %6, %cst_25 {dimension_numbers = #tpu.dot_dimension_numbers<[1], [0], [0], [1], [0, 0, 1, 1], [], []>} : vector<2x32xf32>, vector<32x128xf32>, vector<2x128xf32> -> vector<2x128xf32>
    %138 = arith.addf %136, %137 : vector<2x128xf32>
    %139 = arith.negf %138 : vector<2x128xf32>
    %140 = math.exp %139 : vector<2x128xf32>
    %cst_26 = arith.constant 1.000000e+00 : f32
    %141 = vector.broadcast %cst_26 : f32 to vector<2x128xf32>
    %142 = arith.addf %141, %140 : vector<2x128xf32>
    %143 = arith.divf %141, %142 : vector<2x128xf32>
    %144 = math.tanh %138 : vector<2x128xf32>
    %145 = vector.extract_strided_slice %143 {offsets = [0, 0], sizes = [2, 32], strides = [1, 1]} : vector<2x128xf32> to vector<2x32xf32>
    %146 = vector.extract_strided_slice %143 {offsets = [0, 32], sizes = [2, 32], strides = [1, 1]} : vector<2x128xf32> to vector<2x32xf32>
    %147 = vector.extract_strided_slice %144 {offsets = [0, 64], sizes = [2, 32], strides = [1, 1]} : vector<2x128xf32> to vector<2x32xf32>
    %148 = vector.extract_strided_slice %143 {offsets = [0, 96], sizes = [2, 32], strides = [1, 1]} : vector<2x128xf32> to vector<2x32xf32>
    %149 = arith.mulf %146, %133 : vector<2x32xf32>
    %150 = arith.mulf %145, %147 : vector<2x32xf32>
    %151 = arith.addf %149, %150 : vector<2x32xf32>
    %152 = math.tanh %151 : vector<2x32xf32>
    %153 = arith.mulf %148, %152 : vector<2x32xf32>
    %154 = vector.extract_strided_slice %5 {offsets = [0, 128], sizes = [2, 128], strides = [1, 1]} : vector<16x256xf32> to vector<2x128xf32>
    %cst_27 = arith.constant dense<0.000000e+00> : vector<2x128xf32>
    %155 = tpu.matmul %153, %7, %cst_27 {dimension_numbers = #tpu.dot_dimension_numbers<[1], [0], [0], [1], [0, 0, 1, 1], [], []>} : vector<2x32xf32>, vector<32x128xf32>, vector<2x128xf32> -> vector<2x128xf32>
    %156 = arith.addf %154, %155 : vector<2x128xf32>
    %157 = arith.negf %156 : vector<2x128xf32>
    %158 = math.exp %157 : vector<2x128xf32>
    %cst_28 = arith.constant 1.000000e+00 : f32
    %159 = vector.broadcast %cst_28 : f32 to vector<2x128xf32>
    %160 = arith.addf %159, %158 : vector<2x128xf32>
    %161 = arith.divf %159, %160 : vector<2x128xf32>
    %162 = math.tanh %156 : vector<2x128xf32>
    %163 = vector.extract_strided_slice %161 {offsets = [0, 0], sizes = [2, 32], strides = [1, 1]} : vector<2x128xf32> to vector<2x32xf32>
    %164 = vector.extract_strided_slice %161 {offsets = [0, 32], sizes = [2, 32], strides = [1, 1]} : vector<2x128xf32> to vector<2x32xf32>
    %165 = vector.extract_strided_slice %162 {offsets = [0, 64], sizes = [2, 32], strides = [1, 1]} : vector<2x128xf32> to vector<2x32xf32>
    %166 = vector.extract_strided_slice %161 {offsets = [0, 96], sizes = [2, 32], strides = [1, 1]} : vector<2x128xf32> to vector<2x32xf32>
    %167 = arith.mulf %164, %151 : vector<2x32xf32>
    %168 = arith.mulf %163, %165 : vector<2x32xf32>
    %169 = arith.addf %167, %168 : vector<2x32xf32>
    %170 = math.tanh %169 : vector<2x32xf32>
    %171 = arith.mulf %166, %170 : vector<2x32xf32>
    %c0_29 = arith.constant 0 : index
    %c0_30 = arith.constant 0 : index
    %172 = vector.load %arg8[%c0_29, %c0_30] : memref<16x32xf32, #tpu.memory_space<vmem>>, vector<2x32xf32>
    tpu.vector_store %arg8[%c0_29, %c0_30], %171 {strides = array<i32>} : memref<16x32xf32, #tpu.memory_space<vmem>>, vector<2x32xf32>,
    %173 = vector.extract_strided_slice %5 {offsets = [2, 128], sizes = [2, 128], strides = [1, 1]} : vector<16x256xf32> to vector<2x128xf32>
    %cst_31 = arith.constant dense<0.000000e+00> : vector<2x128xf32>
    %174 = tpu.matmul %171, %7, %cst_31 {dimension_numbers = #tpu.dot_dimension_numbers<[1], [0], [0], [1], [0, 0, 1, 1], [], []>} : vector<2x32xf32>, vector<32x128xf32>, vector<2x128xf32> -> vector<2x128xf32>
    %175 = arith.addf %173, %174 : vector<2x128xf32>
    %176 = arith.negf %175 : vector<2x128xf32>
    %177 = math.exp %176 : vector<2x128xf32>
    %cst_32 = arith.constant 1.000000e+00 : f32
    %178 = vector.broadcast %cst_32 : f32 to vector<2x128xf32>
    %179 = arith.addf %178, %177 : vector<2x128xf32>
    %180 = arith.divf %178, %179 : vector<2x128xf32>
    %181 = math.tanh %175 : vector<2x128xf32>
    %182 = vector.extract_strided_slice %180 {offsets = [0, 0], sizes = [2, 32], strides = [1, 1]} : vector<2x128xf32> to vector<2x32xf32>
    %183 = vector.extract_strided_slice %180 {offsets = [0, 32], sizes = [2, 32], strides = [1, 1]} : vector<2x128xf32> to vector<2x32xf32>
    %184 = vector.extract_strided_slice %181 {offsets = [0, 64], sizes = [2, 32], strides = [1, 1]} : vector<2x128xf32> to vector<2x32xf32>
    %185 = vector.extract_strided_slice %180 {offsets = [0, 96], sizes = [2, 32], strides = [1, 1]} : vector<2x128xf32> to vector<2x32xf32>
    %186 = arith.mulf %183, %169 : vector<2x32xf32>
    %187 = arith.mulf %182, %184 : vector<2x32xf32>
    %188 = arith.addf %186, %187 : vector<2x32xf32>
    %189 = math.tanh %188 : vector<2x32xf32>
    %190 = arith.mulf %185, %189 : vector<2x32xf32>
    %c2 = arith.constant 2 : index
    %c0_33 = arith.constant 0 : index
    %191 = vector.load %arg8[%c2, %c0_33] : memref<16x32xf32, #tpu.memory_space<vmem>>, vector<2x32xf32>
    tpu.vector_store %arg8[%c2, %c0_33], %190 {strides = array<i32>} : memref<16x32xf32, #tpu.memory_space<vmem>>, vector<2x32xf32>,
    %192 = vector.extract_strided_slice %5 {offsets = [4, 128], sizes = [2, 128], strides = [1, 1]} : vector<16x256xf32> to vector<2x128xf32>
    %cst_34 = arith.constant dense<0.000000e+00> : vector<2x128xf32>
    %193 = tpu.matmul %190, %7, %cst_34 {dimension_numbers = #tpu.dot_dimension_numbers<[1], [0], [0], [1], [0, 0, 1, 1], [], []>} : vector<2x32xf32>, vector<32x128xf32>, vector<2x128xf32> -> vector<2x128xf32>
    %194 = arith.addf %192, %193 : vector<2x128xf32>
    %195 = arith.negf %194 : vector<2x128xf32>
    %196 = math.exp %195 : vector<2x128xf32>
    %cst_35 = arith.constant 1.000000e+00 : f32
    %197 = vector.broadcast %cst_35 : f32 to vector<2x128xf32>
    %198 = arith.addf %197, %196 : vector<2x128xf32>
    %199 = arith.divf %197, %198 : vector<2x128xf32>
    %200 = math.tanh %194 : vector<2x128xf32>
    %201 = vector.extract_strided_slice %199 {offsets = [0, 0], sizes = [2, 32], strides = [1, 1]} : vector<2x128xf32> to vector<2x32xf32>
    %202 = vector.extract_strided_slice %199 {offsets = [0, 32], sizes = [2, 32], strides = [1, 1]} : vector<2x128xf32> to vector<2x32xf32>
    %203 = vector.extract_strided_slice %200 {offsets = [0, 64], sizes = [2, 32], strides = [1, 1]} : vector<2x128xf32> to vector<2x32xf32>
    %204 = vector.extract_strided_slice %199 {offsets = [0, 96], sizes = [2, 32], strides = [1, 1]} : vector<2x128xf32> to vector<2x32xf32>
    %205 = arith.mulf %202, %188 : vector<2x32xf32>
    %206 = arith.mulf %201, %203 : vector<2x32xf32>
    %207 = arith.addf %205, %206 : vector<2x32xf32>
    %208 = math.tanh %207 : vector<2x32xf32>
    %209 = arith.mulf %204, %208 : vector<2x32xf32>
    %c4 = arith.constant 4 : index
    %c0_36 = arith.constant 0 : index
    %210 = vector.load %arg8[%c4, %c0_36] : memref<16x32xf32, #tpu.memory_space<vmem>>, vector<2x32xf32>
    tpu.vector_store %arg8[%c4, %c0_36], %209 {strides = array<i32>} : memref<16x32xf32, #tpu.memory_space<vmem>>, vector<2x32xf32>,
    %211 = vector.extract_strided_slice %5 {offsets = [6, 128], sizes = [2, 128], strides = [1, 1]} : vector<16x256xf32> to vector<2x128xf32>
    %cst_37 = arith.constant dense<0.000000e+00> : vector<2x128xf32>
    %212 = tpu.matmul %209, %7, %cst_37 {dimension_numbers = #tpu.dot_dimension_numbers<[1], [0], [0], [1], [0, 0, 1, 1], [], []>} : vector<2x32xf32>, vector<32x128xf32>, vector<2x128xf32> -> vector<2x128xf32>
    %213 = arith.addf %211, %212 : vector<2x128xf32>
    %214 = arith.negf %213 : vector<2x128xf32>
    %215 = math.exp %214 : vector<2x128xf32>
    %cst_38 = arith.constant 1.000000e+00 : f32
    %216 = vector.broadcast %cst_38 : f32 to vector<2x128xf32>
    %217 = arith.addf %216, %215 : vector<2x128xf32>
    %218 = arith.divf %216, %217 : vector<2x128xf32>
    %219 = math.tanh %213 : vector<2x128xf32>
    %220 = vector.extract_strided_slice %218 {offsets = [0, 0], sizes = [2, 32], strides = [1, 1]} : vector<2x128xf32> to vector<2x32xf32>
    %221 = vector.extract_strided_slice %218 {offsets = [0, 32], sizes = [2, 32], strides = [1, 1]} : vector<2x128xf32> to vector<2x32xf32>
    %222 = vector.extract_strided_slice %219 {offsets = [0, 64], sizes = [2, 32], strides = [1, 1]} : vector<2x128xf32> to vector<2x32xf32>
    %223 = vector.extract_strided_slice %218 {offsets = [0, 96], sizes = [2, 32], strides = [1, 1]} : vector<2x128xf32> to vector<2x32xf32>
    %224 = arith.mulf %221, %207 : vector<2x32xf32>
    %225 = arith.mulf %220, %222 : vector<2x32xf32>
    %226 = arith.addf %224, %225 : vector<2x32xf32>
    %227 = math.tanh %226 : vector<2x32xf32>
    %228 = arith.mulf %223, %227 : vector<2x32xf32>
    %c6 = arith.constant 6 : index
    %c0_39 = arith.constant 0 : index
    %229 = vector.load %arg8[%c6, %c0_39] : memref<16x32xf32, #tpu.memory_space<vmem>>, vector<2x32xf32>
    tpu.vector_store %arg8[%c6, %c0_39], %228 {strides = array<i32>} : memref<16x32xf32, #tpu.memory_space<vmem>>, vector<2x32xf32>,
    %230 = vector.extract_strided_slice %5 {offsets = [8, 128], sizes = [2, 128], strides = [1, 1]} : vector<16x256xf32> to vector<2x128xf32>
    %cst_40 = arith.constant dense<0.000000e+00> : vector<2x128xf32>
    %231 = tpu.matmul %228, %7, %cst_40 {dimension_numbers = #tpu.dot_dimension_numbers<[1], [0], [0], [1], [0, 0, 1, 1], [], []>} : vector<2x32xf32>, vector<32x128xf32>, vector<2x128xf32> -> vector<2x128xf32>
    %232 = arith.addf %230, %231 : vector<2x128xf32>
    %233 = arith.negf %232 : vector<2x128xf32>
    %234 = math.exp %233 : vector<2x128xf32>
    %cst_41 = arith.constant 1.000000e+00 : f32
    %235 = vector.broadcast %cst_41 : f32 to vector<2x128xf32>
    %236 = arith.addf %235, %234 : vector<2x128xf32>
    %237 = arith.divf %235, %236 : vector<2x128xf32>
    %238 = math.tanh %232 : vector<2x128xf32>
    %239 = vector.extract_strided_slice %237 {offsets = [0, 0], sizes = [2, 32], strides = [1, 1]} : vector<2x128xf32> to vector<2x32xf32>
    %240 = vector.extract_strided_slice %237 {offsets = [0, 32], sizes = [2, 32], strides = [1, 1]} : vector<2x128xf32> to vector<2x32xf32>
    %241 = vector.extract_strided_slice %238 {offsets = [0, 64], sizes = [2, 32], strides = [1, 1]} : vector<2x128xf32> to vector<2x32xf32>
    %242 = vector.extract_strided_slice %237 {offsets = [0, 96], sizes = [2, 32], strides = [1, 1]} : vector<2x128xf32> to vector<2x32xf32>
    %243 = arith.mulf %240, %226 : vector<2x32xf32>
    %244 = arith.mulf %239, %241 : vector<2x32xf32>
    %245 = arith.addf %243, %244 : vector<2x32xf32>
    %246 = math.tanh %245 : vector<2x32xf32>
    %247 = arith.mulf %242, %246 : vector<2x32xf32>
    %c8 = arith.constant 8 : index
    %c0_42 = arith.constant 0 : index
    %248 = vector.load %arg8[%c8, %c0_42] : memref<16x32xf32, #tpu.memory_space<vmem>>, vector<2x32xf32>
    tpu.vector_store %arg8[%c8, %c0_42], %247 {strides = array<i32>} : memref<16x32xf32, #tpu.memory_space<vmem>>, vector<2x32xf32>,
    %249 = vector.extract_strided_slice %5 {offsets = [10, 128], sizes = [2, 128], strides = [1, 1]} : vector<16x256xf32> to vector<2x128xf32>
    %cst_43 = arith.constant dense<0.000000e+00> : vector<2x128xf32>
    %250 = tpu.matmul %247, %7, %cst_43 {dimension_numbers = #tpu.dot_dimension_numbers<[1], [0], [0], [1], [0, 0, 1, 1], [], []>} : vector<2x32xf32>, vector<32x128xf32>, vector<2x128xf32> -> vector<2x128xf32>
    %251 = arith.addf %249, %250 : vector<2x128xf32>
    %252 = arith.negf %251 : vector<2x128xf32>
    %253 = math.exp %252 : vector<2x128xf32>
    %cst_44 = arith.constant 1.000000e+00 : f32
    %254 = vector.broadcast %cst_44 : f32 to vector<2x128xf32>
    %255 = arith.addf %254, %253 : vector<2x128xf32>
    %256 = arith.divf %254, %255 : vector<2x128xf32>
    %257 = math.tanh %251 : vector<2x128xf32>
    %258 = vector.extract_strided_slice %256 {offsets = [0, 0], sizes = [2, 32], strides = [1, 1]} : vector<2x128xf32> to vector<2x32xf32>
    %259 = vector.extract_strided_slice %256 {offsets = [0, 32], sizes = [2, 32], strides = [1, 1]} : vector<2x128xf32> to vector<2x32xf32>
    %260 = vector.extract_strided_slice %257 {offsets = [0, 64], sizes = [2, 32], strides = [1, 1]} : vector<2x128xf32> to vector<2x32xf32>
    %261 = vector.extract_strided_slice %256 {offsets = [0, 96], sizes = [2, 32], strides = [1, 1]} : vector<2x128xf32> to vector<2x32xf32>
    %262 = arith.mulf %259, %245 : vector<2x32xf32>
    %263 = arith.mulf %258, %260 : vector<2x32xf32>
    %264 = arith.addf %262, %263 : vector<2x32xf32>
    %265 = math.tanh %264 : vector<2x32xf32>
    %266 = arith.mulf %261, %265 : vector<2x32xf32>
    %c10 = arith.constant 10 : index
    %c0_45 = arith.constant 0 : index
    %267 = vector.load %arg8[%c10, %c0_45] : memref<16x32xf32, #tpu.memory_space<vmem>>, vector<2x32xf32>
    tpu.vector_store %arg8[%c10, %c0_45], %266 {strides = array<i32>} : memref<16x32xf32, #tpu.memory_space<vmem>>, vector<2x32xf32>,
    %268 = vector.extract_strided_slice %5 {offsets = [12, 128], sizes = [2, 128], strides = [1, 1]} : vector<16x256xf32> to vector<2x128xf32>
    %cst_46 = arith.constant dense<0.000000e+00> : vector<2x128xf32>
    %269 = tpu.matmul %266, %7, %cst_46 {dimension_numbers = #tpu.dot_dimension_numbers<[1], [0], [0], [1], [0, 0, 1, 1], [], []>} : vector<2x32xf32>, vector<32x128xf32>, vector<2x128xf32> -> vector<2x128xf32>
    %270 = arith.addf %268, %269 : vector<2x128xf32>
    %271 = arith.negf %270 : vector<2x128xf32>
    %272 = math.exp %271 : vector<2x128xf32>
    %cst_47 = arith.constant 1.000000e+00 : f32
    %273 = vector.broadcast %cst_47 : f32 to vector<2x128xf32>
    %274 = arith.addf %273, %272 : vector<2x128xf32>
    %275 = arith.divf %273, %274 : vector<2x128xf32>
    %276 = math.tanh %270 : vector<2x128xf32>
    %277 = vector.extract_strided_slice %275 {offsets = [0, 0], sizes = [2, 32], strides = [1, 1]} : vector<2x128xf32> to vector<2x32xf32>
    %278 = vector.extract_strided_slice %275 {offsets = [0, 32], sizes = [2, 32], strides = [1, 1]} : vector<2x128xf32> to vector<2x32xf32>
    %279 = vector.extract_strided_slice %276 {offsets = [0, 64], sizes = [2, 32], strides = [1, 1]} : vector<2x128xf32> to vector<2x32xf32>
    %280 = vector.extract_strided_slice %275 {offsets = [0, 96], sizes = [2, 32], strides = [1, 1]} : vector<2x128xf32> to vector<2x32xf32>
    %281 = arith.mulf %278, %264 : vector<2x32xf32>
    %282 = arith.mulf %277, %279 : vector<2x32xf32>
    %283 = arith.addf %281, %282 : vector<2x32xf32>
    %284 = math.tanh %283 : vector<2x32xf32>
    %285 = arith.mulf %280, %284 : vector<2x32xf32>
    %c12 = arith.constant 12 : index
    %c0_48 = arith.constant 0 : index
    %286 = vector.load %arg8[%c12, %c0_48] : memref<16x32xf32, #tpu.memory_space<vmem>>, vector<2x32xf32>
    tpu.vector_store %arg8[%c12, %c0_48], %285 {strides = array<i32>} : memref<16x32xf32, #tpu.memory_space<vmem>>, vector<2x32xf32>,
    %287 = vector.extract_strided_slice %5 {offsets = [14, 128], sizes = [2, 128], strides = [1, 1]} : vector<16x256xf32> to vector<2x128xf32>
    %cst_49 = arith.constant dense<0.000000e+00> : vector<2x128xf32>
    %288 = tpu.matmul %285, %7, %cst_49 {dimension_numbers = #tpu.dot_dimension_numbers<[1], [0], [0], [1], [0, 0, 1, 1], [], []>} : vector<2x32xf32>, vector<32x128xf32>, vector<2x128xf32> -> vector<2x128xf32>
    %289 = arith.addf %287, %288 : vector<2x128xf32>
    %290 = arith.negf %289 : vector<2x128xf32>
    %291 = math.exp %290 : vector<2x128xf32>
    %cst_50 = arith.constant 1.000000e+00 : f32
    %292 = vector.broadcast %cst_50 : f32 to vector<2x128xf32>
    %293 = arith.addf %292, %291 : vector<2x128xf32>
    %294 = arith.divf %292, %293 : vector<2x128xf32>
    %295 = math.tanh %289 : vector<2x128xf32>
    %296 = vector.extract_strided_slice %294 {offsets = [0, 0], sizes = [2, 32], strides = [1, 1]} : vector<2x128xf32> to vector<2x32xf32>
    %297 = vector.extract_strided_slice %294 {offsets = [0, 32], sizes = [2, 32], strides = [1, 1]} : vector<2x128xf32> to vector<2x32xf32>
    %298 = vector.extract_strided_slice %295 {offsets = [0, 64], sizes = [2, 32], strides = [1, 1]} : vector<2x128xf32> to vector<2x32xf32>
    %299 = vector.extract_strided_slice %294 {offsets = [0, 96], sizes = [2, 32], strides = [1, 1]} : vector<2x128xf32> to vector<2x32xf32>
    %300 = arith.mulf %297, %283 : vector<2x32xf32>
    %301 = arith.mulf %296, %298 : vector<2x32xf32>
    %302 = arith.addf %300, %301 : vector<2x32xf32>
    %303 = math.tanh %302 : vector<2x32xf32>
    %304 = arith.mulf %299, %303 : vector<2x32xf32>
    %c14 = arith.constant 14 : index
    %c0_51 = arith.constant 0 : index
    %305 = vector.load %arg8[%c14, %c0_51] : memref<16x32xf32, #tpu.memory_space<vmem>>, vector<2x32xf32>
    tpu.vector_store %arg8[%c14, %c0_51], %304 {strides = array<i32>} : memref<16x32xf32, #tpu.memory_space<vmem>>, vector<2x32xf32>,
    %c0_52 = arith.constant 0 : index
    %c0_53 = arith.constant 0 : index
    %306 = vector.load %arg8[%c0_52, %c0_53] : memref<16x32xf32, #tpu.memory_space<vmem>>, vector<16x32xf32>
    %c0_54 = arith.constant 0 : index
    %c0_55 = arith.constant 0 : index
    %307 = vector.load %arg5[%c0_54, %c0_55] : memref<32x4xf32, #tpu.memory_space<vmem>>, vector<32x4xf32>
    %cst_56 = arith.constant dense<0.000000e+00> : vector<16x4xf32>
    %308 = tpu.matmul %306, %307, %cst_56 {dimension_numbers = #tpu.dot_dimension_numbers<[1], [0], [0], [1], [0, 0, 1, 1], [], []>} : vector<16x32xf32>, vector<32x4xf32>, vector<16x4xf32> -> vector<16x4xf32>
    %c0_57 = arith.constant 0 : index
    %c0_58 = arith.constant 0 : index
    %309 = vector.load %arg6[%c0_57, %c0_58] : memref<1x4xf32, #tpu.memory_space<vmem>>, vector<1x4xf32>
    %310 = vector.broadcast %309 : vector<1x4xf32> to vector<16x4xf32>
    %311 = arith.addf %308, %310 : vector<16x4xf32>
    %c0_59 = arith.constant 0 : index
    %c0_60 = arith.constant 0 : index
    %312 = vector.load %arg7[%c0_59, %c0_60] : memref<16x4xf32, #tpu.memory_space<vmem>>, vector<16x4xf32>
    tpu.vector_store %arg7[%c0_59, %c0_60], %311 {strides = array<i32>} : memref<16x4xf32, #tpu.memory_space<vmem>>, vector<16x4xf32>,
    return
  }
}

</mosaic_0001>

<llo_original>
// kernel: tpu_custom_call.1
$region0: #{tpu_custom_call.1}
  #allocation0 [shape = 'u32[]', space=smem, size = 0x4, offset = 0x4, fixed_abs, tag = 'smem constant byte address 0x4 - core index']
  #allocation1 [shape = 'u32[144,128]{1,0:T(1,128)}', space=vmem, size = 0x12000, scoped, tag = 'internal scratch']
  #allocation2 [shape = 'f32[16,32]{1,0:T(8,128)}', space=vmem, size = 0x2000, scoped, tag = 'scratch operand']
  %s0 = inlined_call_operand.vmem [shape: f32[16,4], index: 0, kind: input, shape index: {}]
  %s1 = inlined_call_operand.vmem [shape: f32[4,256], index: 1, kind: input, shape index: {}]
  %s2 = inlined_call_operand.vmem [shape: f32[32,128], index: 2, kind: input, shape index: {}]
  %s3 = inlined_call_operand.hbm [shape: f32[32,128], index: 3, kind: input, shape index: {}]
  %s4 = inlined_call_operand.vmem [shape: f32[1,256], index: 4, kind: input, shape index: {}]
  %s5 = inlined_call_operand.vmem [shape: f32[32,4], index: 5, kind: input, shape index: {}]
  %s6 = inlined_call_operand.vmem [shape: f32[1,4], index: 6, kind: input, shape index: {}]
  %s7 = inlined_call_operand.vmem [shape: f32[16,4], index: 7, kind: output, shape index: {}]
  %s8 = sld [smem:[#allocation0]]
  $region42: #{tpu_custom_call.1} parent=0
    _
  %s10 = ssub.s32 1, %s8
  %s11 = scalar_select 0, %s10, %s8
  $region1: #{tpu_custom_call.1} parent=0
    #allocation3 [shape = 'u8[16384]{0}', space=vmem, size = 0x4000, scoped, tag = 'input window, operand 3, single buffered']
    #allocation4 [shape = 's32[1]{0}', space=sflag, size = 0x4, scoped, tag = 'scoped memory for tpu_custom_call.1']
    %12 = vsyncpa [#allocation4], 0
    // Predicated region
    $region2: #{tpu_custom_call.1} parent=1 // pred_check
      _
    $region3: #{tpu_custom_call.1} parent=1 // pred_check_branch
      %14 = sbr.rel (0) target = $region5
    $region4: #{tpu_custom_call.1} parent=1 // pred_region
      _
    $region5: #{tpu_custom_call.1} parent=1 // pred_fallthru
      _
    // Predicated region
    $region6: #{tpu_custom_call.1} parent=1 // pred_check
      _
    $region7: #{tpu_custom_call.1} parent=1 // pred_check_branch
      %16 = sbr.rel (0) target = $region9
    $region8: #{tpu_custom_call.1} parent=1 // pred_region
      _
    $region9: #{tpu_custom_call.1} parent=1 // pred_fallthru
      _
    // Predicated region
    $region10: #{tpu_custom_call.1} parent=1 // pred_check
      _
    $region11: #{tpu_custom_call.1} parent=1 // pred_check_branch
      %18 = sbr.rel (0) target = $region13
    $region12: #{tpu_custom_call.1} parent=1 // pred_region
      _
    $region13: #{tpu_custom_call.1} parent=1 // pred_fallthru
      _
    // Predicated region
    $region14: #{tpu_custom_call.1} parent=1 // pred_check
      _
    $region15: #{tpu_custom_call.1} parent=1 // pred_check_branch
      %20 = sbr.rel (0) target = $region17
    $region16: #{tpu_custom_call.1} parent=1 // pred_region
      %s22 = ssub.s32 512, 512
      %23 = vsyncadd [#allocation4], %s22
      %s24 = sshll.u32 [#allocation3], 4
      %s25 = int_to_ptr.vmem [resolvable:$true] %s24
      %30 = dma.hbm_to_vmem [thread:$0]  %s3, 512, %s25, [#allocation4], 128, 128, 8
    $region17: #{tpu_custom_call.1} parent=1 // pred_fallthru
      _
    // Predicated region
    $region18: #{tpu_custom_call.1} parent=1 // pred_check
      _
    $region19: #{tpu_custom_call.1} parent=1 // pred_check_branch
      %32 = sbr.rel (0) target = $region21
    $region20: #{tpu_custom_call.1} parent=1 // pred_region
      _
    $region21: #{tpu_custom_call.1} parent=1 // pred_fallthru
      _
    // Predicated region
    $region22: #{tpu_custom_call.1} parent=1 // pred_check
      _
    $region23: #{tpu_custom_call.1} parent=1 // pred_check_branch
      %34 = sbr.rel (0) target = $region25
    $region24: #{tpu_custom_call.1} parent=1 // pred_region
      _
    $region25: #{tpu_custom_call.1} parent=1 // pred_fallthru
      _
    // Predicated region
    $region26: #{tpu_custom_call.1} parent=1 // pred_check
      _
    $region27: #{tpu_custom_call.1} parent=1 // pred_check_branch
      %36 = sbr.rel (0) target = $region29
    $region28: #{tpu_custom_call.1} parent=1 // pred_region
      _
    $region29: #{tpu_custom_call.1} parent=1 // pred_fallthru
      _
    // Predicated region
    $region30: #{tpu_custom_call.1} parent=1 // pred_check
      _
    $region31: #{tpu_custom_call.1} parent=1 // pred_check_branch
      %38 = sbr.rel (0) target = $region33
    $region32: #{tpu_custom_call.1} parent=1 // pred_region
      %39 = dma.done [#allocation4], 512
    $region33: #{tpu_custom_call.1} parent=1 // pred_fallthru
      _
    %v40 = vld [vmem:[%s0] sm:$0xff]
    %v41 = vld [vmem:[%s0 + $0x8] sm:$0xff]
    %v42 = vld [vmem:[%s1] sm:$0xff]
    %v43 = vld [vmem:[%s4] sm:$0x3]
    %v45 = vlaneseq
    %v46 = vshrl.u32 %v45, 7
    %v47 = vsub.s32 0, %v46
    %v48 = vrot.slane %v43, %v47
    %v49 = vlaneseq
    %v50 = vshrl.u32 %v49, 7
    %v51 = vsub.s32 1, %v50
    %v52 = vrot.slane %v43, %v51
    %v56 = vcombine.high %v42, %v42
    %vm57 = vcmask 31744
    %v59 = vsel %vm57, %v40, 0
    %v62 = vsel %vm57, %v41, 0
    %vm64 = vcmask 1043456
    %v65 = vsel %vm64, %v42, 0
    %v67 = vsel %vm64, %v56, 0
    %69 = vmatprep.subr.mxu0 0.0
    %70 = vmatpush1.msra.mxu0 0.0
    %71 = vmatprep.subr.mxu0 0.0
    %72 = vmatpush1.msra.mxu0 0.0
    %73 = vmatprep.subr.mxu0 0.0
    %74 = vmatpush1.msra.mxu0 0.0
    %75 = vmatprep.subr.mxu0 0.0
    %76 = vmatpush1.msra.mxu0 0.0
    %77 = vmatprep.subr.mxu0 0.0
    %78 = vmatpush1.msra.mxu0 0.0
    %79 = vmatprep.subr.mxu0 0.0
    %80 = vmatpush1.msra.mxu0 0.0
    %81 = vmatprep.subr.mxu0 0.0
    %82 = vmatpush1.msra.mxu0 0.0
    %83 = vmatprep.subr.mxu0 0.0
    %84 = vmatpush1.msra.mxu0 0.0
    %85 = vmatprep.subr.mxu0 0.0
    %86 = vmatpush1.msra.mxu0 0.0
    %87 = vmatprep.subr.mxu0 0.0
    %88 = vmatpush1.msra.mxu0 0.0
    %89 = vmatprep.subr.mxu0 0.0
    %90 = vmatpush1.msra.mxu0 0.0
    %91 = vmatprep.subr.mxu0 0.0
    %92 = vmatpush1.msra.mxu0 0.0
    %93 = vmatprep.subr.mxu0 0.0
    %94 = vmatpush1.msra.mxu0 0.0
    %95 = vmatprep.subr.mxu0 0.0
    %96 = vmatpush1.msra.mxu0 0.0
    %97 = vmatprep.subr.mxu0 0.0
    %98 = vmatpush1.msra.mxu0 0.0
    %99 = vmatprep.subr.mxu0 %v67
    %100 = vmatpush1.msra.mxu0 %v65
    %101 = vmatprep.subr.mxu0 0.0
    %102 = vmatpush2.msra.mxu0 0.0
    %103 = vmatprep.subr.mxu0 0.0
    %104 = vmatpush2.msra.mxu0 0.0
    %105 = vmatprep.subr.mxu0 0.0
    %106 = vmatpush2.msra.mxu0 0.0
    %107 = vmatprep.subr.mxu0 0.0
    %108 = vmatpush2.msra.mxu0 0.0
    %109 = vmatprep.subr.mxu0 0.0
    %110 = vmatpush2.msra.mxu0 0.0
    %111 = vmatprep.subr.mxu0 0.0
    %112 = vmatpush2.msra.mxu0 0.0
    %113 = vmatprep.subr.mxu0 0.0
    %114 = vmatpush2.msra.mxu0 0.0
    %115 = vmatprep.subr.mxu0 0.0
    %116 = vmatpush2.msra.mxu0 0.0
    %117 = vmatprep.subr.mxu0 0.0
    %118 = vmatpush2.msra.mxu0 0.0
    %119 = vmatprep.subr.mxu0 0.0
    %120 = vmatpush2.msra.mxu0 0.0
    %121 = vmatprep.subr.mxu0 0.0
    %122 = vmatpush2.msra.mxu0 0.0
    %123 = vmatprep.subr.mxu0 0.0
    %124 = vmatpush2.msra.mxu0 0.0
    %125 = vmatprep.subr.mxu0 0.0
    %126 = vmatpush2.msra.mxu0 0.0
    %127 = vmatprep.subr.mxu0 0.0
    %128 = vmatpush2.msra.mxu0 0.0
    %129 = vmatprep.subr.mxu0 0.0
    %130 = vmatpush2.msra.mxu0 0.0
    %131 = vmatprep.subr.mxu0 0.0
    %132 = vmatpush2.msra.mxu0 0.0
    %133 = vmatprep.mubr.f32.mxu0 0.0
    %134 = vmatmul.mubr.f32.gmra.mxu0 %v59
    %v135 = vpop.f32.mrf.mxu0
    %v136 = vadd.f32 %v48, %v135
    %v137 = vpop.f32.mrf.mxu0
    %v138 = vadd.f32 %v52, %v137
    %139 = vmatprep.mubr.f32.mxu0 0.0
    %140 = vmatmul.mubr.f32.gmra.mxu0 %v62
    %v141 = vpop.f32.mrf.mxu0
    %v142 = vadd.f32 %v48, %v141
    %v143 = vpop.f32.mrf.mxu0
    %v144 = vadd.f32 %v52, %v143
    %145 = vdwg.mxu0
    %v146 = vld [vmem:[%s2] sm:$0xff]
    %v147 = vld [vmem:[%s2 + $0x8] sm:$0xff]
    %v148 = vld [vmem:[%s2 + $0x10] sm:$0xff]
    %v149 = vld [vmem:[%s2 + $0x18] sm:$0xff]
    %v150 = vld [vmem:[#allocation3] sm:$0xff]
    %v151 = vld [vmem:[#allocation3 + $0x8] sm:$0xff]
    %v152 = vld [vmem:[#allocation3 + $0x10] sm:$0xff]
    %v153 = vld [vmem:[#allocation3 + $0x18] sm:$0xff]
    %vm154 = vcmask 261120
    %v156 = vsel %vm154, 0.0, 0
    %158 = vmatprep.subr.mxu0 0.0
    %159 = vmatpush1.msra.mxu0 0.0
    %160 = vmatprep.subr.mxu0 0.0
    %161 = vmatpush1.msra.mxu0 0.0
    %162 = vmatprep.subr.mxu0 0.0
    %163 = vmatpush1.msra.mxu0 0.0
    %164 = vmatprep.subr.mxu0 0.0
    %165 = vmatpush1.msra.mxu0 0.0
    %166 = vmatprep.subr.mxu0 0.0
    %167 = vmatpush1.msra.mxu0 0.0
    %168 = vmatprep.subr.mxu0 0.0
    %169 = vmatpush1.msra.mxu0 0.0
    %170 = vmatprep.subr.mxu0 0.0
    %171 = vmatpush1.msra.mxu0 0.0
    %172 = vmatprep.subr.mxu0 0.0
    %173 = vmatpush1.msra.mxu0 0.0
    %174 = vmatprep.subr.mxu0 0.0
    %175 = vmatpush1.msra.mxu0 0.0
    %176 = vmatprep.subr.mxu0 0.0
    %177 = vmatpush1.msra.mxu0 0.0
    %178 = vmatprep.subr.mxu0 0.0
    %179 = vmatpush1.msra.mxu0 0.0
    %180 = vmatprep.subr.mxu0 0.0
    %181 = vmatpush1.msra.mxu0 0.0
    %182 = vmatprep.subr.mxu0 0.0
    %183 = vmatpush1.msra.mxu0 %v149
    %184 = vmatprep.subr.mxu0 0.0
    %185 = vmatpush1.msra.mxu0 %v148
    %186 = vmatprep.subr.mxu0 0.0
    %187 = vmatpush1.msra.mxu0 %v147
    %188 = vmatprep.subr.mxu0 0.0
    %189 = vmatpush1.msra.mxu0 %v146
    %190 = vmatprep.subr.mxu0 0.0
    %191 = vmatpush2.msra.mxu0 0.0
    %192 = vmatprep.subr.mxu0 0.0
    %193 = vmatpush2.msra.mxu0 0.0
    %194 = vmatprep.subr.mxu0 0.0
    %195 = vmatpush2.msra.mxu0 0.0
    %196 = vmatprep.subr.mxu0 0.0
    %197 = vmatpush2.msra.mxu0 0.0
    %198 = vmatprep.subr.mxu0 0.0
    %199 = vmatpush2.msra.mxu0 0.0
    %200 = vmatprep.subr.mxu0 0.0
    %201 = vmatpush2.msra.mxu0 0.0
    %202 = vmatprep.subr.mxu0 0.0
    %203 = vmatpush2.msra.mxu0 0.0
    %204 = vmatprep.subr.mxu0 0.0
    %205 = vmatpush2.msra.mxu0 0.0
    %206 = vmatprep.subr.mxu0 0.0
    %207 = vmatpush2.msra.mxu0 0.0
    %208 = vmatprep.subr.mxu0 0.0
    %209 = vmatpush2.msra.mxu0 0.0
    %210 = vmatprep.subr.mxu0 0.0
    %211 = vmatpush2.msra.mxu0 0.0
    %212 = vmatprep.subr.mxu0 0.0
    %213 = vmatpush2.msra.mxu0 0.0
    %214 = vmatprep.subr.mxu0 0.0
    %215 = vmatpush2.msra.mxu0 0.0
    %216 = vmatprep.subr.mxu0 0.0
    %217 = vmatpush2.msra.mxu0 0.0
    %218 = vmatprep.subr.mxu0 0.0
    %219 = vmatpush2.msra.mxu0 0.0
    %220 = vmatprep.subr.mxu0 0.0
    %221 = vmatpush2.msra.mxu0 0.0
    %222 = vmatprep.mubr.f32.mxu0 0.0
    %223 = vmatmul.mubr.f32.gmra.mxu0 %v156
    %v224 = vpop.f32.mrf.mxu0
    %v225 = vadd.f32 0.0, %v224
    %v226 = vpop.f32.mrf.mxu0
    %227 = vdwg.mxu0
    %v228 = vadd.f32 %v136, %v225
    %v229 = vxor.u32 %v228, 2147483648
    %v230 = vmul.f32 %v229, 1.442695
    %v231 = vpow.pop %v230
    %v232 = vadd.f32 %v231, 1.0
    %v233 = vrcp.pop %v232
    %v234 = vmul.f32 1.0, %v233
    %v235 = vtanh.pop %v228
    %v236 = vmul.f32 %v234, 0.0
    %238 = vrot.lane.b32.xlu0 %v235, 64
    %v239 = vpop.permute.xlu0 %238
    %v241 = vmul.f32 %v234, %v239
    %243 = vrot.lane.b32.xlu0 %v241, 32
    %v244 = vpop.permute.xlu0 %243
    %v246 = vadd.f32 %v236, %v244
    %v247 = vtanh.pop %v246
    %249 = vrot.lane.b32.xlu0 %v247, 64
    %v250 = vpop.permute.xlu0 %249
    %v252 = vmul.f32 %v234, %v250
    %254 = vrot.lane.b32.xlu0 %v252, 32
    %v255 = vpop.permute.xlu0 %254
    %v256 = vsel %vm154, %v255, 0
    %258 = vmatprep.subr.mxu0 0.0
    %259 = vmatpush1.msra.mxu0 0.0
    %260 = vmatprep.subr.mxu0 0.0
    %261 = vmatpush1.msra.mxu0 0.0
    %262 = vmatprep.subr.mxu0 0.0
    %263 = vmatpush1.msra.mxu0 0.0
    %264 = vmatprep.subr.mxu0 0.0
    %265 = vmatpush1.msra.mxu0 0.0
    %266 = vmatprep.subr.mxu0 0.0
    %267 = vmatpush1.msra.mxu0 0.0
    %268 = vmatprep.subr.mxu0 0.0
    %269 = vmatpush1.msra.mxu0 0.0
    %270 = vmatprep.subr.mxu0 0.0
    %271 = vmatpush1.msra.mxu0 0.0
    %272 = vmatprep.subr.mxu0 0.0
    %273 = vmatpush1.msra.mxu0 0.0
    %274 = vmatprep.subr.mxu0 0.0
    %275 = vmatpush1.msra.mxu0 0.0
    %276 = vmatprep.subr.mxu0 0.0
    %277 = vmatpush1.msra.mxu0 0.0
    %278 = vmatprep.subr.mxu0 0.0
    %279 = vmatpush1.msra.mxu0 0.0
    %280 = vmatprep.subr.mxu0 0.0
    %281 = vmatpush1.msra.mxu0 0.0
    %282 = vmatprep.subr.mxu0 0.0
    %283 = vmatpush1.msra.mxu0 %v149
    %284 = vmatprep.subr.mxu0 0.0
    %285 = vmatpush1.msra.mxu0 %v148
    %286 = vmatprep.subr.mxu0 0.0
    %287 = vmatpush1.msra.mxu0 %v147
    %288 = vmatprep.subr.mxu0 0.0
    %289 = vmatpush1.msra.mxu0 %v146
    %290 = vmatprep.subr.mxu0 0.0
    %291 = vmatpush2.msra.mxu0 0.0
    %292 = vmatprep.subr.mxu0 0.0
    %293 = vmatpush2.msra.mxu0 0.0
    %294 = vmatprep.subr.mxu0 0.0
    %295 = vmatpush2.msra.mxu0 0.0
    %296 = vmatprep.subr.mxu0 0.0
    %297 = vmatpush2.msra.mxu0 0.0
    %298 = vmatprep.subr.mxu0 0.0
    %299 = vmatpush2.msra.mxu0 0.0
    %300 = vmatprep.subr.mxu0 0.0
    %301 = vmatpush2.msra.mxu0 0.0
    %302 = vmatprep.subr.mxu0 0.0
    %303 = vmatpush2.msra.mxu0 0.0
    %304 = vmatprep.subr.mxu0 0.0
    %305 = vmatpush2.msra.mxu0 0.0
    %306 = vmatprep.subr.mxu0 0.0
    %307 = vmatpush2.msra.mxu0 0.0
    %308 = vmatprep.subr.mxu0 0.0
    %309 = vmatpush2.msra.mxu0 0.0
    %310 = vmatprep.subr.mxu0 0.0
    %311 = vmatpush2.msra.mxu0 0.0
    %312 = vmatprep.subr.mxu0 0.0
    %313 = vmatpush2.msra.mxu0 0.0
    %314 = vmatprep.subr.mxu0 0.0
    %315 = vmatpush2.msra.mxu0 0.0
    %316 = vmatprep.subr.mxu0 0.0
    %317 = vmatpush2.msra.mxu0 0.0
    %318 = vmatprep.subr.mxu0 0.0
    %319 = vmatpush2.msra.mxu0 0.0
    %320 = vmatprep.subr.mxu0 0.0
    %321 = vmatpush2.msra.mxu0 0.0
    %322 = vmatprep.mubr.f32.mxu0 0.0
    %323 = vmatmul.mubr.f32.gmra.mxu0 %v256
    %v324 = vpop.f32.mrf.mxu0
    %v325 = vadd.f32 0.0, %v324
    %v326 = vpop.f32.mrf.mxu0
    %327 = vdwg.mxu0
    %v329 = vrot.slane %v325, 6
    %v331 = vadd.f32 %v136, %v329
    %v332 = vxor.u32 %v331, 2147483648
    %v333 = vmul.f32 %v332, 1.442695
    %v334 = vpow.pop %v333
    %v335 = vadd.f32 %v334, 1.0
    %v336 = vrcp.pop %v335
    %v337 = vmul.f32 1.0, %v336
    %v338 = vtanh.pop %v331
    %v340 = vrot.slane %v246, 6
    %v342 = vmul.f32 %v337, %v340
    %344 = vrot.lane.b32.xlu0 %v338, 64
    %v345 = vpop.permute.xlu0 %344
    %v347 = vmul.f32 %v337, %v345
    %349 = vrot.lane.b32.xlu0 %v347, 32
    %v350 = vpop.permute.xlu0 %349
    %v352 = vadd.f32 %v342, %v350
    %v353 = vtanh.pop %v352
    %355 = vrot.lane.b32.xlu0 %v353, 64
    %v356 = vpop.permute.xlu0 %355
    %v358 = vmul.f32 %v337, %v356
    %v360 = vrot.slane %v358, 2
    %361 = vrot.lane.b32.xlu0 %v360, 32
    %v362 = vpop.permute.xlu0 %361
    %v363 = vsel %vm154, %v362, 0
    %365 = vmatprep.subr.mxu0 0.0
    %366 = vmatpush1.msra.mxu0 0.0
    %367 = vmatprep.subr.mxu0 0.0
    %368 = vmatpush1.msra.mxu0 0.0
    %369 = vmatprep.subr.mxu0 0.0
    %370 = vmatpush1.msra.mxu0 0.0
    %371 = vmatprep.subr.mxu0 0.0
    %372 = vmatpush1.msra.mxu0 0.0
    %373 = vmatprep.subr.mxu0 0.0
    %374 = vmatpush1.msra.mxu0 0.0
    %375 = vmatprep.subr.mxu0 0.0
    %376 = vmatpush1.msra.mxu0 0.0
    %377 = vmatprep.subr.mxu0 0.0
    %378 = vmatpush1.msra.mxu0 0.0
    %379 = vmatprep.subr.mxu0 0.0
    %380 = vmatpush1.msra.mxu0 0.0
    %381 = vmatprep.subr.mxu0 0.0
    %382 = vmatpush1.msra.mxu0 0.0
    %383 = vmatprep.subr.mxu0 0.0
    %384 = vmatpush1.msra.mxu0 0.0
    %385 = vmatprep.subr.mxu0 0.0
    %386 = vmatpush1.msra.mxu0 0.0
    %387 = vmatprep.subr.mxu0 0.0
    %388 = vmatpush1.msra.mxu0 0.0
    %389 = vmatprep.subr.mxu0 0.0
    %390 = vmatpush1.msra.mxu0 %v149
    %391 = vmatprep.subr.mxu0 0.0
    %392 = vmatpush1.msra.mxu0 %v148
    %393 = vmatprep.subr.mxu0 0.0
    %394 = vmatpush1.msra.mxu0 %v147
    %395 = vmatprep.subr.mxu0 0.0
    %396 = vmatpush1.msra.mxu0 %v146
    %397 = vmatprep.subr.mxu0 0.0
    %398 = vmatpush2.msra.mxu0 0.0
    %399 = vmatprep.subr.mxu0 0.0
    %400 = vmatpush2.msra.mxu0 0.0
    %401 = vmatprep.subr.mxu0 0.0
    %402 = vmatpush2.msra.mxu0 0.0
    %403 = vmatprep.subr.mxu0 0.0
    %404 = vmatpush2.msra.mxu0 0.0
    %405 = vmatprep.subr.mxu0 0.0
    %406 = vmatpush2.msra.mxu0 0.0
    %407 = vmatprep.subr.mxu0 0.0
    %408 = vmatpush2.msra.mxu0 0.0
    %409 = vmatprep.subr.mxu0 0.0
    %410 = vmatpush2.msra.mxu0 0.0
    %411 = vmatprep.subr.mxu0 0.0
    %412 = vmatpush2.msra.mxu0 0.0
    %413 = vmatprep.subr.mxu0 0.0
    %414 = vmatpush2.msra.mxu0 0.0
    %415 = vmatprep.subr.mxu0 0.0
    %416 = vmatpush2.msra.mxu0 0.0
    %417 = vmatprep.subr.mxu0 0.0
    %418 = vmatpush2.msra.mxu0 0.0
    %419 = vmatprep.subr.mxu0 0.0
    %420 = vmatpush2.msra.mxu0 0.0
    %421 = vmatprep.subr.mxu0 0.0
    %422 = vmatpush2.msra.mxu0 0.0
    %423 = vmatprep.subr.mxu0 0.0
    %424 = vmatpush2.msra.mxu0 0.0
    %425 = vmatprep.subr.mxu0 0.0
    %426 = vmatpush2.msra.mxu0 0.0
    %427 = vmatprep.subr.mxu0 0.0
    %428 = vmatpush2.msra.mxu0 0.0
    %429 = vmatprep.mubr.f32.mxu0 0.0
    %430 = vmatmul.mubr.f32.gmra.mxu0 %v363
    %v431 = vpop.f32.mrf.mxu0
    %v432 = vadd.f32 0.0, %v431
    %v433 = vpop.f32.mrf.mxu0
    %434 = vdwg.mxu0
    %v436 = vrot.slane %v432, 4
    %v438 = vadd.f32 %v136, %v436
    %v439 = vxor.u32 %v438, 2147483648
    %v440 = vmul.f32 %v439, 1.442695
    %v441 = vpow.pop %v440
    %v442 = vadd.f32 %v441, 1.0
    %v443 = vrcp.pop %v442
    %v444 = vmul.f32 1.0, %v443
    %v445 = vtanh.pop %v438
    %v447 = vrot.slane %v352, 6
    %v449 = vmul.f32 %v444, %v447
    %451 = vrot.lane.b32.xlu0 %v445, 64
    %v452 = vpop.permute.xlu0 %451
    %v454 = vmul.f32 %v444, %v452
    %456 = vrot.lane.b32.xlu0 %v454, 32
    %v457 = vpop.permute.xlu0 %456
    %v459 = vadd.f32 %v449, %v457
    %v460 = vtanh.pop %v459
    %462 = vrot.lane.b32.xlu0 %v460, 64
    %v463 = vpop.permute.xlu0 %462
    %v465 = vmul.f32 %v444, %v463
    %v467 = vrot.slane %v465, 4
    %468 = vrot.lane.b32.xlu0 %v467, 32
    %v469 = vpop.permute.xlu0 %468
    %v470 = vsel %vm154, %v469, 0
    %472 = vmatprep.subr.mxu0 0.0
    %473 = vmatpush1.msra.mxu0 0.0
    %474 = vmatprep.subr.mxu0 0.0
    %475 = vmatpush1.msra.mxu0 0.0
    %476 = vmatprep.subr.mxu0 0.0
    %477 = vmatpush1.msra.mxu0 0.0
    %478 = vmatprep.subr.mxu0 0.0
    %479 = vmatpush1.msra.mxu0 0.0
    %480 = vmatprep.subr.mxu0 0.0
    %481 = vmatpush1.msra.mxu0 0.0
    %482 = vmatprep.subr.mxu0 0.0
    %483 = vmatpush1.msra.mxu0 0.0
    %484 = vmatprep.subr.mxu0 0.0
    %485 = vmatpush1.msra.mxu0 0.0
    %486 = vmatprep.subr.mxu0 0.0
    %487 = vmatpush1.msra.mxu0 0.0
    %488 = vmatprep.subr.mxu0 0.0
    %489 = vmatpush1.msra.mxu0 0.0
    %490 = vmatprep.subr.mxu0 0.0
    %491 = vmatpush1.msra.mxu0 0.0
    %492 = vmatprep.subr.mxu0 0.0
    %493 = vmatpush1.msra.mxu0 0.0
    %494 = vmatprep.subr.mxu0 0.0
    %495 = vmatpush1.msra.mxu0 0.0
    %496 = vmatprep.subr.mxu0 0.0
    %497 = vmatpush1.msra.mxu0 %v149
    %498 = vmatprep.subr.mxu0 0.0
    %499 = vmatpush1.msra.mxu0 %v148
    %500 = vmatprep.subr.mxu0 0.0
    %501 = vmatpush1.msra.mxu0 %v147
    %502 = vmatprep.subr.mxu0 0.0
    %503 = vmatpush1.msra.mxu0 %v146
    %504 = vmatprep.subr.mxu0 0.0
    %505 = vmatpush2.msra.mxu0 0.0
    %506 = vmatprep.subr.mxu0 0.0
    %507 = vmatpush2.msra.mxu0 0.0
    %508 = vmatprep.subr.mxu0 0.0
    %509 = vmatpush2.msra.mxu0 0.0
    %510 = vmatprep.subr.mxu0 0.0
    %511 = vmatpush2.msra.mxu0 0.0
    %512 = vmatprep.subr.mxu0 0.0
    %513 = vmatpush2.msra.mxu0 0.0
    %514 = vmatprep.subr.mxu0 0.0
    %515 = vmatpush2.msra.mxu0 0.0
    %516 = vmatprep.subr.mxu0 0.0
    %517 = vmatpush2.msra.mxu0 0.0
    %518 = vmatprep.subr.mxu0 0.0
    %519 = vmatpush2.msra.mxu0 0.0
    %520 = vmatprep.subr.mxu0 0.0
    %521 = vmatpush2.msra.mxu0 0.0
    %522 = vmatprep.subr.mxu0 0.0
    %523 = vmatpush2.msra.mxu0 0.0
    %524 = vmatprep.subr.mxu0 0.0
    %525 = vmatpush2.msra.mxu0 0.0
    %526 = vmatprep.subr.mxu0 0.0
    %527 = vmatpush2.msra.mxu0 0.0
    %528 = vmatprep.subr.mxu0 0.0
    %529 = vmatpush2.msra.mxu0 0.0
    %530 = vmatprep.subr.mxu0 0.0
    %531 = vmatpush2.msra.mxu0 0.0
    %532 = vmatprep.subr.mxu0 0.0
    %533 = vmatpush2.msra.mxu0 0.0
    %534 = vmatprep.subr.mxu0 0.0
    %535 = vmatpush2.msra.mxu0 0.0
    %536 = vmatprep.mubr.f32.mxu0 0.0
    %537 = vmatmul.mubr.f32.gmra.mxu0 %v470
    %v538 = vpop.f32.mrf.mxu0
    %v539 = vadd.f32 0.0, %v538
    %v540 = vpop.f32.mrf.mxu0
    %541 = vdwg.mxu0
    %v543 = vrot.slane %v539, 2
    %v545 = vadd.f32 %v136, %v543
    %v546 = vxor.u32 %v545, 2147483648
    %v547 = vmul.f32 %v546, 1.442695
    %v548 = vpow.pop %v547
    %v549 = vadd.f32 %v548, 1.0
    %v550 = vrcp.pop %v549
    %v551 = vmul.f32 1.0, %v550
    %v552 = vtanh.pop %v545
    %v554 = vrot.slane %v459, 6
    %v556 = vmul.f32 %v551, %v554
    %558 = vrot.lane.b32.xlu0 %v552, 64
    %v559 = vpop.permute.xlu0 %558
    %v561 = vmul.f32 %v551, %v559
    %563 = vrot.lane.b32.xlu0 %v561, 32
    %v564 = vpop.permute.xlu0 %563
    %v566 = vadd.f32 %v556, %v564
    %v567 = vtanh.pop %v566
    %569 = vrot.lane.b32.xlu0 %v567, 64
    %v570 = vpop.permute.xlu0 %569
    %v572 = vmul.f32 %v551, %v570
    %v574 = vrot.slane %v572, 6
    %575 = vrot.lane.b32.xlu0 %v574, 32
    %v576 = vpop.permute.xlu0 %575
    %v577 = vsel %vm154, %v576, 0
    %579 = vmatprep.subr.mxu0 0.0
    %580 = vmatpush1.msra.mxu0 0.0
    %581 = vmatprep.subr.mxu0 0.0
    %582 = vmatpush1.msra.mxu0 0.0
    %583 = vmatprep.subr.mxu0 0.0
    %584 = vmatpush1.msra.mxu0 0.0
    %585 = vmatprep.subr.mxu0 0.0
    %586 = vmatpush1.msra.mxu0 0.0
    %587 = vmatprep.subr.mxu0 0.0
    %588 = vmatpush1.msra.mxu0 0.0
    %589 = vmatprep.subr.mxu0 0.0
    %590 = vmatpush1.msra.mxu0 0.0
    %591 = vmatprep.subr.mxu0 0.0
    %592 = vmatpush1.msra.mxu0 0.0
    %593 = vmatprep.subr.mxu0 0.0
    %594 = vmatpush1.msra.mxu0 0.0
    %595 = vmatprep.subr.mxu0 0.0
    %596 = vmatpush1.msra.mxu0 0.0
    %597 = vmatprep.subr.mxu0 0.0
    %598 = vmatpush1.msra.mxu0 0.0
    %599 = vmatprep.subr.mxu0 0.0
    %600 = vmatpush1.msra.mxu0 0.0
    %601 = vmatprep.subr.mxu0 0.0
    %602 = vmatpush1.msra.mxu0 0.0
    %603 = vmatprep.subr.mxu0 0.0
    %604 = vmatpush1.msra.mxu0 %v149
    %605 = vmatprep.subr.mxu0 0.0
    %606 = vmatpush1.msra.mxu0 %v148
    %607 = vmatprep.subr.mxu0 0.0
    %608 = vmatpush1.msra.mxu0 %v147
    %609 = vmatprep.subr.mxu0 0.0
    %610 = vmatpush1.msra.mxu0 %v146
    %611 = vmatprep.subr.mxu0 0.0
    %612 = vmatpush2.msra.mxu0 0.0
    %613 = vmatprep.subr.mxu0 0.0
    %614 = vmatpush2.msra.mxu0 0.0
    %615 = vmatprep.subr.mxu0 0.0
    %616 = vmatpush2.msra.mxu0 0.0
    %617 = vmatprep.subr.mxu0 0.0
    %618 = vmatpush2.msra.mxu0 0.0
    %619 = vmatprep.subr.mxu0 0.0
    %620 = vmatpush2.msra.mxu0 0.0
    %621 = vmatprep.subr.mxu0 0.0
    %622 = vmatpush2.msra.mxu0 0.0
    %623 = vmatprep.subr.mxu0 0.0
    %624 = vmatpush2.msra.mxu0 0.0
    %625 = vmatprep.subr.mxu0 0.0
    %626 = vmatpush2.msra.mxu0 0.0
    %627 = vmatprep.subr.mxu0 0.0
    %628 = vmatpush2.msra.mxu0 0.0
    %629 = vmatprep.subr.mxu0 0.0
    %630 = vmatpush2.msra.mxu0 0.0
    %631 = vmatprep.subr.mxu0 0.0
    %632 = vmatpush2.msra.mxu0 0.0
    %633 = vmatprep.subr.mxu0 0.0
    %634 = vmatpush2.msra.mxu0 0.0
    %635 = vmatprep.subr.mxu0 0.0
    %636 = vmatpush2.msra.mxu0 0.0
    %637 = vmatprep.subr.mxu0 0.0
    %638 = vmatpush2.msra.mxu0 0.0
    %639 = vmatprep.subr.mxu0 0.0
    %640 = vmatpush2.msra.mxu0 0.0
    %641 = vmatprep.subr.mxu0 0.0
    %642 = vmatpush2.msra.mxu0 0.0
    %643 = vmatprep.mubr.f32.mxu0 0.0
    %644 = vmatmul.mubr.f32.gmra.mxu0 %v577
    %v645 = vpop.f32.mrf.mxu0
    %v646 = vadd.f32 0.0, %v645
    %v647 = vpop.f32.mrf.mxu0
    %648 = vdwg.mxu0
    %v649 = vadd.f32 %v142, %v646
    %v650 = vxor.u32 %v649, 2147483648
    %v651 = vmul.f32 %v650, 1.442695
    %v652 = vpow.pop %v651
    %v653 = vadd.f32 %v652, 1.0
    %v654 = vrcp.pop %v653
    %v655 = vmul.f32 1.0, %v654
    %v656 = vtanh.pop %v649
    %v658 = vrot.slane %v566, 6
    %v660 = vmul.f32 %v655, %v658
    %662 = vrot.lane.b32.xlu0 %v656, 64
    %v663 = vpop.permute.xlu0 %662
    %v665 = vmul.f32 %v655, %v663
    %667 = vrot.lane.b32.xlu0 %v665, 32
    %v668 = vpop.permute.xlu0 %667
    %v670 = vadd.f32 %v660, %v668
    %v671 = vtanh.pop %v670
    %673 = vrot.lane.b32.xlu0 %v671, 64
    %v674 = vpop.permute.xlu0 %673
    %v676 = vmul.f32 %v655, %v674
    %678 = vrot.lane.b32.xlu0 %v676, 32
    %v679 = vpop.permute.xlu0 %678
    %v680 = vsel %vm154, %v679, 0
    %682 = vmatprep.subr.mxu0 0.0
    %683 = vmatpush1.msra.mxu0 0.0
    %684 = vmatprep.subr.mxu0 0.0
    %685 = vmatpush1.msra.mxu0 0.0
    %686 = vmatprep.subr.mxu0 0.0
    %687 = vmatpush1.msra.mxu0 0.0
    %688 = vmatprep.subr.mxu0 0.0
    %689 = vmatpush1.msra.mxu0 0.0
    %690 = vmatprep.subr.mxu0 0.0
    %691 = vmatpush1.msra.mxu0 0.0
    %692 = vmatprep.subr.mxu0 0.0
    %693 = vmatpush1.msra.mxu0 0.0
    %694 = vmatprep.subr.mxu0 0.0
    %695 = vmatpush1.msra.mxu0 0.0
    %696 = vmatprep.subr.mxu0 0.0
    %697 = vmatpush1.msra.mxu0 0.0
    %698 = vmatprep.subr.mxu0 0.0
    %699 = vmatpush1.msra.mxu0 0.0
    %700 = vmatprep.subr.mxu0 0.0
    %701 = vmatpush1.msra.mxu0 0.0
    %702 = vmatprep.subr.mxu0 0.0
    %703 = vmatpush1.msra.mxu0 0.0
    %704 = vmatprep.subr.mxu0 0.0
    %705 = vmatpush1.msra.mxu0 0.0
    %706 = vmatprep.subr.mxu0 0.0
    %707 = vmatpush1.msra.mxu0 %v149
    %708 = vmatprep.subr.mxu0 0.0
    %709 = vmatpush1.msra.mxu0 %v148
    %710 = vmatprep.subr.mxu0 0.0
    %711 = vmatpush1.msra.mxu0 %v147
    %712 = vmatprep.subr.mxu0 0.0
    %713 = vmatpush1.msra.mxu0 %v146
    %714 = vmatprep.subr.mxu0 0.0
    %715 = vmatpush2.msra.mxu0 0.0
    %716 = vmatprep.subr.mxu0 0.0
    %717 = vmatpush2.msra.mxu0 0.0
    %718 = vmatprep.subr.mxu0 0.0
    %719 = vmatpush2.msra.mxu0 0.0
    %720 = vmatprep.subr.mxu0 0.0
    %721 = vmatpush2.msra.mxu0 0.0
    %722 = vmatprep.subr.mxu0 0.0
    %723 = vmatpush2.msra.mxu0 0.0
    %724 = vmatprep.subr.mxu0 0.0
    %725 = vmatpush2.msra.mxu0 0.0
    %726 = vmatprep.subr.mxu0 0.0
    %727 = vmatpush2.msra.mxu0 0.0
    %728 = vmatprep.subr.mxu0 0.0
    %729 = vmatpush2.msra.mxu0 0.0
    %730 = vmatprep.subr.mxu0 0.0
    %731 = vmatpush2.msra.mxu0 0.0
    %732 = vmatprep.subr.mxu0 0.0
    %733 = vmatpush2.msra.mxu0 0.0
    %734 = vmatprep.subr.mxu0 0.0
    %735 = vmatpush2.msra.mxu0 0.0
    %736 = vmatprep.subr.mxu0 0.0
    %737 = vmatpush2.msra.mxu0 0.0
    %738 = vmatprep.subr.mxu0 0.0
    %739 = vmatpush2.msra.mxu0 0.0
    %740 = vmatprep.subr.mxu0 0.0
    %741 = vmatpush2.msra.mxu0 0.0
    %742 = vmatprep.subr.mxu0 0.0
    %743 = vmatpush2.msra.mxu0 0.0
    %744 = vmatprep.subr.mxu0 0.0
    %745 = vmatpush2.msra.mxu0 0.0
    %746 = vmatprep.mubr.f32.mxu0 0.0
    %747 = vmatmul.mubr.f32.gmra.mxu0 %v680
    %v748 = vpop.f32.mrf.mxu0
    %v749 = vadd.f32 0.0, %v748
    %v750 = vpop.f32.mrf.mxu0
    %751 = vdwg.mxu0
    %v753 = vrot.slane %v749, 6
    %v755 = vadd.f32 %v142, %v753
    %v756 = vxor.u32 %v755, 2147483648
    %v757 = vmul.f32 %v756, 1.442695
    %v758 = vpow.pop %v757
    %v759 = vadd.f32 %v758, 1.0
    %v760 = vrcp.pop %v759
    %v761 = vmul.f32 1.0, %v760
    %v762 = vtanh.pop %v755
    %v764 = vrot.slane %v670, 6
    %v766 = vmul.f32 %v761, %v764
    %768 = vrot.lane.b32.xlu0 %v762, 64
    %v769 = vpop.permute.xlu0 %768
    %v771 = vmul.f32 %v761, %v769
    %773 = vrot.lane.b32.xlu0 %v771, 32
    %v774 = vpop.permute.xlu0 %773
    %v776 = vadd.f32 %v766, %v774
    %v777 = vtanh.pop %v776
    %779 = vrot.lane.b32.xlu0 %v777, 64
    %v780 = vpop.permute.xlu0 %779
    %v782 = vmul.f32 %v761, %v780
    %v784 = vrot.slane %v782, 2
    %785 = vrot.lane.b32.xlu0 %v784, 32
    %v786 = vpop.permute.xlu0 %785
    %v787 = vsel %vm154, %v786, 0
    %789 = vmatprep.subr.mxu0 0.0
    %790 = vmatpush1.msra.mxu0 0.0
    %791 = vmatprep.subr.mxu0 0.0
    %792 = vmatpush1.msra.mxu0 0.0
    %793 = vmatprep.subr.mxu0 0.0
    %794 = vmatpush1.msra.mxu0 0.0
    %795 = vmatprep.subr.mxu0 0.0
    %796 = vmatpush1.msra.mxu0 0.0
    %797 = vmatprep.subr.mxu0 0.0
    %798 = vmatpush1.msra.mxu0 0.0
    %799 = vmatprep.subr.mxu0 0.0
    %800 = vmatpush1.msra.mxu0 0.0
    %801 = vmatprep.subr.mxu0 0.0
    %802 = vmatpush1.msra.mxu0 0.0
    %803 = vmatprep.subr.mxu0 0.0
    %804 = vmatpush1.msra.mxu0 0.0
    %805 = vmatprep.subr.mxu0 0.0
    %806 = vmatpush1.msra.mxu0 0.0
    %807 = vmatprep.subr.mxu0 0.0
    %808 = vmatpush1.msra.mxu0 0.0
    %809 = vmatprep.subr.mxu0 0.0
    %810 = vmatpush1.msra.mxu0 0.0
    %811 = vmatprep.subr.mxu0 0.0
    %812 = vmatpush1.msra.mxu0 0.0
    %813 = vmatprep.subr.mxu0 0.0
    %814 = vmatpush1.msra.mxu0 %v149
    %815 = vmatprep.subr.mxu0 0.0
    %816 = vmatpush1.msra.mxu0 %v148
    %817 = vmatprep.subr.mxu0 0.0
    %818 = vmatpush1.msra.mxu0 %v147
    %819 = vmatprep.subr.mxu0 0.0
    %820 = vmatpush1.msra.mxu0 %v146
    %821 = vmatprep.subr.mxu0 0.0
    %822 = vmatpush2.msra.mxu0 0.0
    %823 = vmatprep.subr.mxu0 0.0
    %824 = vmatpush2.msra.mxu0 0.0
    %825 = vmatprep.subr.mxu0 0.0
    %826 = vmatpush2.msra.mxu0 0.0
    %827 = vmatprep.subr.mxu0 0.0
    %828 = vmatpush2.msra.mxu0 0.0
    %829 = vmatprep.subr.mxu0 0.0
    %830 = vmatpush2.msra.mxu0 0.0
    %831 = vmatprep.subr.mxu0 0.0
    %832 = vmatpush2.msra.mxu0 0.0
    %833 = vmatprep.subr.mxu0 0.0
    %834 = vmatpush2.msra.mxu0 0.0
    %835 = vmatprep.subr.mxu0 0.0
    %836 = vmatpush2.msra.mxu0 0.0
    %837 = vmatprep.subr.mxu0 0.0
    %838 = vmatpush2.msra.mxu0 0.0
    %839 = vmatprep.subr.mxu0 0.0
    %840 = vmatpush2.msra.mxu0 0.0
    %841 = vmatprep.subr.mxu0 0.0
    %842 = vmatpush2.msra.mxu0 0.0
    %843 = vmatprep.subr.mxu0 0.0
    %844 = vmatpush2.msra.mxu0 0.0
    %845 = vmatprep.subr.mxu0 0.0
    %846 = vmatpush2.msra.mxu0 0.0
    %847 = vmatprep.subr.mxu0 0.0
    %848 = vmatpush2.msra.mxu0 0.0
    %849 = vmatprep.subr.mxu0 0.0
    %850 = vmatpush2.msra.mxu0 0.0
    %851 = vmatprep.subr.mxu0 0.0
    %852 = vmatpush2.msra.mxu0 0.0
    %853 = vmatprep.mubr.f32.mxu0 0.0
    %854 = vmatmul.mubr.f32.gmra.mxu0 %v787
    %v855 = vpop.f32.mrf.mxu0
    %v856 = vadd.f32 0.0, %v855
    %v857 = vpop.f32.mrf.mxu0
    %858 = vdwg.mxu0
    %v860 = vrot.slane %v856, 4
    %v862 = vadd.f32 %v142, %v860
    %v863 = vxor.u32 %v862, 2147483648
    %v864 = vmul.f32 %v863, 1.442695
    %v865 = vpow.pop %v864
    %v866 = vadd.f32 %v865, 1.0
    %v867 = vrcp.pop %v866
    %v868 = vmul.f32 1.0, %v867
    %v869 = vtanh.pop %v862
    %v871 = vrot.slane %v776, 6
    %v873 = vmul.f32 %v868, %v871
    %875 = vrot.lane.b32.xlu0 %v869, 64
    %v876 = vpop.permute.xlu0 %875
    %v878 = vmul.f32 %v868, %v876
    %880 = vrot.lane.b32.xlu0 %v878, 32
    %v881 = vpop.permute.xlu0 %880
    %v883 = vadd.f32 %v873, %v881
    %v884 = vtanh.pop %v883
    %886 = vrot.lane.b32.xlu0 %v884, 64
    %v887 = vpop.permute.xlu0 %886
    %v889 = vmul.f32 %v868, %v887
    %v891 = vrot.slane %v889, 4
    %892 = vrot.lane.b32.xlu0 %v891, 32
    %v893 = vpop.permute.xlu0 %892
    %v894 = vsel %vm154, %v893, 0
    %896 = vmatprep.subr.mxu0 0.0
    %897 = vmatpush1.msra.mxu0 0.0
    %898 = vmatprep.subr.mxu0 0.0
    %899 = vmatpush1.msra.mxu0 0.0
    %900 = vmatprep.subr.mxu0 0.0
    %901 = vmatpush1.msra.mxu0 0.0
    %902 = vmatprep.subr.mxu0 0.0
    %903 = vmatpush1.msra.mxu0 0.0
    %904 = vmatprep.subr.mxu0 0.0
    %905 = vmatpush1.msra.mxu0 0.0
    %906 = vmatprep.subr.mxu0 0.0
    %907 = vmatpush1.msra.mxu0 0.0
    %908 = vmatprep.subr.mxu0 0.0
    %909 = vmatpush1.msra.mxu0 0.0
    %910 = vmatprep.subr.mxu0 0.0
    %911 = vmatpush1.msra.mxu0 0.0
    %912 = vmatprep.subr.mxu0 0.0
    %913 = vmatpush1.msra.mxu0 0.0
    %914 = vmatprep.subr.mxu0 0.0
    %915 = vmatpush1.msra.mxu0 0.0
    %916 = vmatprep.subr.mxu0 0.0
    %917 = vmatpush1.msra.mxu0 0.0
    %918 = vmatprep.subr.mxu0 0.0
    %919 = vmatpush1.msra.mxu0 0.0
    %920 = vmatprep.subr.mxu0 0.0
    %921 = vmatpush1.msra.mxu0 %v149
    %922 = vmatprep.subr.mxu0 0.0
    %923 = vmatpush1.msra.mxu0 %v148
    %924 = vmatprep.subr.mxu0 0.0
    %925 = vmatpush1.msra.mxu0 %v147
    %926 = vmatprep.subr.mxu0 0.0
    %927 = vmatpush1.msra.mxu0 %v146
    %928 = vmatprep.subr.mxu0 0.0
    %929 = vmatpush2.msra.mxu0 0.0
    %930 = vmatprep.subr.mxu0 0.0
    %931 = vmatpush2.msra.mxu0 0.0
    %932 = vmatprep.subr.mxu0 0.0
    %933 = vmatpush2.msra.mxu0 0.0
    %934 = vmatprep.subr.mxu0 0.0
    %935 = vmatpush2.msra.mxu0 0.0
    %936 = vmatprep.subr.mxu0 0.0
    %937 = vmatpush2.msra.mxu0 0.0
    %938 = vmatprep.subr.mxu0 0.0
    %939 = vmatpush2.msra.mxu0 0.0
    %940 = vmatprep.subr.mxu0 0.0
    %941 = vmatpush2.msra.mxu0 0.0
    %942 = vmatprep.subr.mxu0 0.0
    %943 = vmatpush2.msra.mxu0 0.0
    %944 = vmatprep.subr.mxu0 0.0
    %945 = vmatpush2.msra.mxu0 0.0
    %946 = vmatprep.subr.mxu0 0.0
    %947 = vmatpush2.msra.mxu0 0.0
    %948 = vmatprep.subr.mxu0 0.0
    %949 = vmatpush2.msra.mxu0 0.0
    %950 = vmatprep.subr.mxu0 0.0
    %951 = vmatpush2.msra.mxu0 0.0
    %952 = vmatprep.subr.mxu0 0.0
    %953 = vmatpush2.msra.mxu0 0.0
    %954 = vmatprep.subr.mxu0 0.0
    %955 = vmatpush2.msra.mxu0 0.0
    %956 = vmatprep.subr.mxu0 0.0
    %957 = vmatpush2.msra.mxu0 0.0
    %958 = vmatprep.subr.mxu0 0.0
    %959 = vmatpush2.msra.mxu0 0.0
    %960 = vmatprep.mubr.f32.mxu0 0.0
    %961 = vmatmul.mubr.f32.gmra.mxu0 %v894
    %v962 = vpop.f32.mrf.mxu0
    %v963 = vadd.f32 0.0, %v962
    %v964 = vpop.f32.mrf.mxu0
    %965 = vdwg.mxu0
    %v967 = vrot.slane %v963, 2
    %v969 = vadd.f32 %v142, %v967
    %v970 = vxor.u32 %v969, 2147483648
    %v971 = vmul.f32 %v970, 1.442695
    %v972 = vpow.pop %v971
    %v973 = vadd.f32 %v972, 1.0
    %v974 = vrcp.pop %v973
    %v975 = vmul.f32 1.0, %v974
    %v976 = vtanh.pop %v969
    %v978 = vrot.slane %v883, 6
    %v980 = vmul.f32 %v975, %v978
    %982 = vrot.lane.b32.xlu0 %v976, 64
    %v983 = vpop.permute.xlu0 %982
    %v985 = vmul.f32 %v975, %v983
    %987 = vrot.lane.b32.xlu0 %v985, 32
    %v988 = vpop.permute.xlu0 %987
    %v990 = vadd.f32 %v980, %v988
    %v991 = vtanh.pop %v990
    %993 = vrot.lane.b32.xlu0 %v991, 64
    %v994 = vpop.permute.xlu0 %993
    %v996 = vmul.f32 %v975, %v994
    %v998 = vrot.slane %v996, 6
    %999 = vrot.lane.b32.xlu0 %v998, 32
    %v1000 = vpop.permute.xlu0 %999
    %v1001 = vsel %vm154, %v1000, 0
    %1003 = vmatprep.subr.mxu0 0.0
    %1004 = vmatpush1.msra.mxu0 0.0
    %1005 = vmatprep.subr.mxu0 0.0
    %1006 = vmatpush1.msra.mxu0 0.0
    %1007 = vmatprep.subr.mxu0 0.0
    %1008 = vmatpush1.msra.mxu0 0.0
    %1009 = vmatprep.subr.mxu0 0.0
    %1010 = vmatpush1.msra.mxu0 0.0
    %1011 = vmatprep.subr.mxu0 0.0
    %1012 = vmatpush1.msra.mxu0 0.0
    %1013 = vmatprep.subr.mxu0 0.0
    %1014 = vmatpush1.msra.mxu0 0.0
    %1015 = vmatprep.subr.mxu0 0.0
    %1016 = vmatpush1.msra.mxu0 0.0
    %1017 = vmatprep.subr.mxu0 0.0
    %1018 = vmatpush1.msra.mxu0 0.0
    %1019 = vmatprep.subr.mxu0 0.0
    %1020 = vmatpush1.msra.mxu0 0.0
    %1021 = vmatprep.subr.mxu0 0.0
    %1022 = vmatpush1.msra.mxu0 0.0
    %1023 = vmatprep.subr.mxu0 0.0
    %1024 = vmatpush1.msra.mxu0 0.0
    %1025 = vmatprep.subr.mxu0 0.0
    %1026 = vmatpush1.msra.mxu0 0.0
    %1027 = vmatprep.subr.mxu0 0.0
    %1028 = vmatpush1.msra.mxu0 %v153
    %1029 = vmatprep.subr.mxu0 0.0
    %1030 = vmatpush1.msra.mxu0 %v152
    %1031 = vmatprep.subr.mxu0 0.0
    %1032 = vmatpush1.msra.mxu0 %v151
    %1033 = vmatprep.subr.mxu0 0.0
    %1034 = vmatpush1.msra.mxu0 %v150
    %1035 = vmatprep.subr.mxu0 0.0
    %1036 = vmatpush2.msra.mxu0 0.0
    %1037 = vmatprep.subr.mxu0 0.0
    %1038 = vmatpush2.msra.mxu0 0.0
    %1039 = vmatprep.subr.mxu0 0.0
    %1040 = vmatpush2.msra.mxu0 0.0
    %1041 = vmatprep.subr.mxu0 0.0
    %1042 = vmatpush2.msra.mxu0 0.0
    %1043 = vmatprep.subr.mxu0 0.0
    %1044 = vmatpush2.msra.mxu0 0.0
    %1045 = vmatprep.subr.mxu0 0.0
    %1046 = vmatpush2.msra.mxu0 0.0
    %1047 = vmatprep.subr.mxu0 0.0
    %1048 = vmatpush2.msra.mxu0 0.0
    %1049 = vmatprep.subr.mxu0 0.0
    %1050 = vmatpush2.msra.mxu0 0.0
    %1051 = vmatprep.subr.mxu0 0.0
    %1052 = vmatpush2.msra.mxu0 0.0
    %1053 = vmatprep.subr.mxu0 0.0
    %1054 = vmatpush2.msra.mxu0 0.0
    %1055 = vmatprep.subr.mxu0 0.0
    %1056 = vmatpush2.msra.mxu0 0.0
    %1057 = vmatprep.subr.mxu0 0.0
    %1058 = vmatpush2.msra.mxu0 0.0
    %1059 = vmatprep.subr.mxu0 0.0
    %1060 = vmatpush2.msra.mxu0 0.0
    %1061 = vmatprep.subr.mxu0 0.0
    %1062 = vmatpush2.msra.mxu0 0.0
    %1063 = vmatprep.subr.mxu0 0.0
    %1064 = vmatpush2.msra.mxu0 0.0
    %1065 = vmatprep.subr.mxu0 0.0
    %1066 = vmatpush2.msra.mxu0 0.0
    %1067 = vmatprep.mubr.f32.mxu0 0.0
    %1068 = vmatmul.mubr.f32.gmra.mxu0 %v1001
    %v1069 = vpop.f32.mrf.mxu0
    %v1070 = vadd.f32 0.0, %v1069
    %v1071 = vpop.f32.mrf.mxu0
    %1072 = vdwg.mxu0
    %v1073 = vadd.f32 %v138, %v1070
    %v1074 = vxor.u32 %v1073, 2147483648
    %v1075 = vmul.f32 %v1074, 1.442695
    %v1076 = vpow.pop %v1075
    %v1077 = vadd.f32 %v1076, 1.0
    %v1078 = vrcp.pop %v1077
    %v1079 = vmul.f32 1.0, %v1078
    %v1080 = vtanh.pop %v1073
    %v1082 = vrot.slane %v990, 6
    %v1084 = vmul.f32 %v1079, %v1082
    %1086 = vrot.lane.b32.xlu0 %v1080, 64
    %v1087 = vpop.permute.xlu0 %1086
    %v1089 = vmul.f32 %v1079, %v1087
    %1091 = vrot.lane.b32.xlu0 %v1089, 32
    %v1092 = vpop.permute.xlu0 %1091
    %v1094 = vadd.f32 %v1084, %v1092
    %v1095 = vtanh.pop %v1094
    %1097 = vrot.lane.b32.xlu0 %v1095, 64
    %v1098 = vpop.permute.xlu0 %1097
    %v1100 = vmul.f32 %v1079, %v1098
    %1102 = vrot.lane.b32.xlu0 %v1100, 32
    %v1103 = vpop.permute.xlu0 %1102
    %vm1105 = vcmask 254976
    %1106 = vst.msk [vmem:[#allocation2] sm:$0x3] %vm1105, %v1103
    %v1107 = vsel %vm154, %v1103, 0
    %1109 = vmatprep.subr.mxu0 0.0
    %1110 = vmatpush1.msra.mxu0 0.0
    %1111 = vmatprep.subr.mxu0 0.0
    %1112 = vmatpush1.msra.mxu0 0.0
    %1113 = vmatprep.subr.mxu0 0.0
    %1114 = vmatpush1.msra.mxu0 0.0
    %1115 = vmatprep.subr.mxu0 0.0
    %1116 = vmatpush1.msra.mxu0 0.0
    %1117 = vmatprep.subr.mxu0 0.0
    %1118 = vmatpush1.msra.mxu0 0.0
    %1119 = vmatprep.subr.mxu0 0.0
    %1120 = vmatpush1.msra.mxu0 0.0
    %1121 = vmatprep.subr.mxu0 0.0
    %1122 = vmatpush1.msra.mxu0 0.0
    %1123 = vmatprep.subr.mxu0 0.0
    %1124 = vmatpush1.msra.mxu0 0.0
    %1125 = vmatprep.subr.mxu0 0.0
    %1126 = vmatpush1.msra.mxu0 0.0
    %1127 = vmatprep.subr.mxu0 0.0
    %1128 = vmatpush1.msra.mxu0 0.0
    %1129 = vmatprep.subr.mxu0 0.0
    %1130 = vmatpush1.msra.mxu0 0.0
    %1131 = vmatprep.subr.mxu0 0.0
    %1132 = vmatpush1.msra.mxu0 0.0
    %1133 = vmatprep.subr.mxu0 0.0
    %1134 = vmatpush1.msra.mxu0 %v153
    %1135 = vmatprep.subr.mxu0 0.0
    %1136 = vmatpush1.msra.mxu0 %v152
    %1137 = vmatprep.subr.mxu0 0.0
    %1138 = vmatpush1.msra.mxu0 %v151
    %1139 = vmatprep.subr.mxu0 0.0
    %1140 = vmatpush1.msra.mxu0 %v150
    %1141 = vmatprep.subr.mxu0 0.0
    %1142 = vmatpush2.msra.mxu0 0.0
    %1143 = vmatprep.subr.mxu0 0.0
    %1144 = vmatpush2.msra.mxu0 0.0
    %1145 = vmatprep.subr.mxu0 0.0
    %1146 = vmatpush2.msra.mxu0 0.0
    %1147 = vmatprep.subr.mxu0 0.0
    %1148 = vmatpush2.msra.mxu0 0.0
    %1149 = vmatprep.subr.mxu0 0.0
    %1150 = vmatpush2.msra.mxu0 0.0
    %1151 = vmatprep.subr.mxu0 0.0
    %1152 = vmatpush2.msra.mxu0 0.0
    %1153 = vmatprep.subr.mxu0 0.0
    %1154 = vmatpush2.msra.mxu0 0.0
    %1155 = vmatprep.subr.mxu0 0.0
    %1156 = vmatpush2.msra.mxu0 0.0
    %1157 = vmatprep.subr.mxu0 0.0
    %1158 = vmatpush2.msra.mxu0 0.0
    %1159 = vmatprep.subr.mxu0 0.0
    %1160 = vmatpush2.msra.mxu0 0.0
    %1161 = vmatprep.subr.mxu0 0.0
    %1162 = vmatpush2.msra.mxu0 0.0
    %1163 = vmatprep.subr.mxu0 0.0
    %1164 = vmatpush2.msra.mxu0 0.0
    %1165 = vmatprep.subr.mxu0 0.0
    %1166 = vmatpush2.msra.mxu0 0.0
    %1167 = vmatprep.subr.mxu0 0.0
    %1168 = vmatpush2.msra.mxu0 0.0
    %1169 = vmatprep.subr.mxu0 0.0
    %1170 = vmatpush2.msra.mxu0 0.0
    %1171 = vmatprep.subr.mxu0 0.0
    %1172 = vmatpush2.msra.mxu0 0.0
    %1173 = vmatprep.mubr.f32.mxu0 0.0
    %1174 = vmatmul.mubr.f32.gmra.mxu0 %v1107
    %v1175 = vpop.f32.mrf.mxu0
    %v1176 = vadd.f32 0.0, %v1175
    %v1177 = vpop.f32.mrf.mxu0
    %1178 = vdwg.mxu0
    %v1180 = vrot.slane %v1176, 6
    %v1182 = vadd.f32 %v138, %v1180
    %v1183 = vxor.u32 %v1182, 2147483648
    %v1184 = vmul.f32 %v1183, 1.442695
    %v1185 = vpow.pop %v1184
    %v1186 = vadd.f32 %v1185, 1.0
    %v1187 = vrcp.pop %v1186
    %v1188 = vmul.f32 1.0, %v1187
    %v1189 = vtanh.pop %v1182
    %v1191 = vrot.slane %v1094, 6
    %v1193 = vmul.f32 %v1188, %v1191
    %1195 = vrot.lane.b32.xlu0 %v1189, 64
    %v1196 = vpop.permute.xlu0 %1195
    %v1198 = vmul.f32 %v1188, %v1196
    %1200 = vrot.lane.b32.xlu0 %v1198, 32
    %v1201 = vpop.permute.xlu0 %1200
    %v1203 = vadd.f32 %v1193, %v1201
    %v1204 = vtanh.pop %v1203
    %1206 = vrot.lane.b32.xlu0 %v1204, 64
    %v1207 = vpop.permute.xlu0 %1206
    %v1209 = vmul.f32 %v1188, %v1207
    %1211 = vrot.lane.b32.xlu0 %v1209, 32
    %v1212 = vpop.permute.xlu0 %1211
    %vm1214 = vcmask 257026
    %1215 = vst.msk [vmem:[#allocation2] sm:$0xc] %vm1214, %v1212
    %v1216 = vrot.slane %v1209, 2
    %1217 = vrot.lane.b32.xlu0 %v1216, 32
    %v1218 = vpop.permute.xlu0 %1217
    %v1219 = vsel %vm154, %v1218, 0
    %1221 = vmatprep.subr.mxu0 0.0
    %1222 = vmatpush1.msra.mxu0 0.0
    %1223 = vmatprep.subr.mxu0 0.0
    %1224 = vmatpush1.msra.mxu0 0.0
    %1225 = vmatprep.subr.mxu0 0.0
    %1226 = vmatpush1.msra.mxu0 0.0
    %1227 = vmatprep.subr.mxu0 0.0
    %1228 = vmatpush1.msra.mxu0 0.0
    %1229 = vmatprep.subr.mxu0 0.0
    %1230 = vmatpush1.msra.mxu0 0.0
    %1231 = vmatprep.subr.mxu0 0.0
    %1232 = vmatpush1.msra.mxu0 0.0
    %1233 = vmatprep.subr.mxu0 0.0
    %1234 = vmatpush1.msra.mxu0 0.0
    %1235 = vmatprep.subr.mxu0 0.0
    %1236 = vmatpush1.msra.mxu0 0.0
    %1237 = vmatprep.subr.mxu0 0.0
    %1238 = vmatpush1.msra.mxu0 0.0
    %1239 = vmatprep.subr.mxu0 0.0
    %1240 = vmatpush1.msra.mxu0 0.0
    %1241 = vmatprep.subr.mxu0 0.0
    %1242 = vmatpush1.msra.mxu0 0.0
    %1243 = vmatprep.subr.mxu0 0.0
    %1244 = vmatpush1.msra.mxu0 0.0
    %1245 = vmatprep.subr.mxu0 0.0
    %1246 = vmatpush1.msra.mxu0 %v153
    %1247 = vmatprep.subr.mxu0 0.0
    %1248 = vmatpush1.msra.mxu0 %v152
    %1249 = vmatprep.subr.mxu0 0.0
    %1250 = vmatpush1.msra.mxu0 %v151
    %1251 = vmatprep.subr.mxu0 0.0
    %1252 = vmatpush1.msra.mxu0 %v150
    %1253 = vmatprep.subr.mxu0 0.0
    %1254 = vmatpush2.msra.mxu0 0.0
    %1255 = vmatprep.subr.mxu0 0.0
    %1256 = vmatpush2.msra.mxu0 0.0
    %1257 = vmatprep.subr.mxu0 0.0
    %1258 = vmatpush2.msra.mxu0 0.0
    %1259 = vmatprep.subr.mxu0 0.0
    %1260 = vmatpush2.msra.mxu0 0.0
    %1261 = vmatprep.subr.mxu0 0.0
    %1262 = vmatpush2.msra.mxu0 0.0
    %1263 = vmatprep.subr.mxu0 0.0
    %1264 = vmatpush2.msra.mxu0 0.0
    %1265 = vmatprep.subr.mxu0 0.0
    %1266 = vmatpush2.msra.mxu0 0.0
    %1267 = vmatprep.subr.mxu0 0.0
    %1268 = vmatpush2.msra.mxu0 0.0
    %1269 = vmatprep.subr.mxu0 0.0
    %1270 = vmatpush2.msra.mxu0 0.0
    %1271 = vmatprep.subr.mxu0 0.0
    %1272 = vmatpush2.msra.mxu0 0.0
    %1273 = vmatprep.subr.mxu0 0.0
    %1274 = vmatpush2.msra.mxu0 0.0
    %1275 = vmatprep.subr.mxu0 0.0
    %1276 = vmatpush2.msra.mxu0 0.0
    %1277 = vmatprep.subr.mxu0 0.0
    %1278 = vmatpush2.msra.mxu0 0.0
    %1279 = vmatprep.subr.mxu0 0.0
    %1280 = vmatpush2.msra.mxu0 0.0
    %1281 = vmatprep.subr.mxu0 0.0
    %1282 = vmatpush2.msra.mxu0 0.0
    %1283 = vmatprep.subr.mxu0 0.0
    %1284 = vmatpush2.msra.mxu0 0.0
    %1285 = vmatprep.mubr.f32.mxu0 0.0
    %1286 = vmatmul.mubr.f32.gmra.mxu0 %v1219
    %v1287 = vpop.f32.mrf.mxu0
    %v1288 = vadd.f32 0.0, %v1287
    %v1289 = vpop.f32.mrf.mxu0
    %1290 = vdwg.mxu0
    %v1292 = vrot.slane %v1288, 4
    %v1294 = vadd.f32 %v138, %v1292
    %v1295 = vxor.u32 %v1294, 2147483648
    %v1296 = vmul.f32 %v1295, 1.442695
    %v1297 = vpow.pop %v1296
    %v1298 = vadd.f32 %v1297, 1.0
    %v1299 = vrcp.pop %v1298
    %v1300 = vmul.f32 1.0, %v1299
    %v1301 = vtanh.pop %v1294
    %v1303 = vrot.slane %v1203, 6
    %v1305 = vmul.f32 %v1300, %v1303
    %1307 = vrot.lane.b32.xlu0 %v1301, 64
    %v1308 = vpop.permute.xlu0 %1307
    %v1310 = vmul.f32 %v1300, %v1308
    %1312 = vrot.lane.b32.xlu0 %v1310, 32
    %v1313 = vpop.permute.xlu0 %1312
    %v1315 = vadd.f32 %v1305, %v1313
    %v1316 = vtanh.pop %v1315
    %1318 = vrot.lane.b32.xlu0 %v1316, 64
    %v1319 = vpop.permute.xlu0 %1318
    %v1321 = vmul.f32 %v1300, %v1319
    %1323 = vrot.lane.b32.xlu0 %v1321, 32
    %v1324 = vpop.permute.xlu0 %1323
    %vm1326 = vcmask 259076
    %1327 = vst.msk [vmem:[#allocation2] sm:$0x30] %vm1326, %v1324
    %v1328 = vrot.slane %v1321, 4
    %1329 = vrot.lane.b32.xlu0 %v1328, 32
    %v1330 = vpop.permute.xlu0 %1329
    %v1331 = vsel %vm154, %v1330, 0
    %1333 = vmatprep.subr.mxu0 0.0
    %1334 = vmatpush1.msra.mxu0 0.0
    %1335 = vmatprep.subr.mxu0 0.0
    %1336 = vmatpush1.msra.mxu0 0.0
    %1337 = vmatprep.subr.mxu0 0.0
    %1338 = vmatpush1.msra.mxu0 0.0
    %1339 = vmatprep.subr.mxu0 0.0
    %1340 = vmatpush1.msra.mxu0 0.0
    %1341 = vmatprep.subr.mxu0 0.0
    %1342 = vmatpush1.msra.mxu0 0.0
    %1343 = vmatprep.subr.mxu0 0.0
    %1344 = vmatpush1.msra.mxu0 0.0
    %1345 = vmatprep.subr.mxu0 0.0
    %1346 = vmatpush1.msra.mxu0 0.0
    %1347 = vmatprep.subr.mxu0 0.0
    %1348 = vmatpush1.msra.mxu0 0.0
    %1349 = vmatprep.subr.mxu0 0.0
    %1350 = vmatpush1.msra.mxu0 0.0
    %1351 = vmatprep.subr.mxu0 0.0
    %1352 = vmatpush1.msra.mxu0 0.0
    %1353 = vmatprep.subr.mxu0 0.0
    %1354 = vmatpush1.msra.mxu0 0.0
    %1355 = vmatprep.subr.mxu0 0.0
    %1356 = vmatpush1.msra.mxu0 0.0
    %1357 = vmatprep.subr.mxu0 0.0
    %1358 = vmatpush1.msra.mxu0 %v153
    %1359 = vmatprep.subr.mxu0 0.0
    %1360 = vmatpush1.msra.mxu0 %v152
    %1361 = vmatprep.subr.mxu0 0.0
    %1362 = vmatpush1.msra.mxu0 %v151
    %1363 = vmatprep.subr.mxu0 0.0
    %1364 = vmatpush1.msra.mxu0 %v150
    %1365 = vmatprep.subr.mxu0 0.0
    %1366 = vmatpush2.msra.mxu0 0.0
    %1367 = vmatprep.subr.mxu0 0.0
    %1368 = vmatpush2.msra.mxu0 0.0
    %1369 = vmatprep.subr.mxu0 0.0
    %1370 = vmatpush2.msra.mxu0 0.0
    %1371 = vmatprep.subr.mxu0 0.0
    %1372 = vmatpush2.msra.mxu0 0.0
    %1373 = vmatprep.subr.mxu0 0.0
    %1374 = vmatpush2.msra.mxu0 0.0
    %1375 = vmatprep.subr.mxu0 0.0
    %1376 = vmatpush2.msra.mxu0 0.0
    %1377 = vmatprep.subr.mxu0 0.0
    %1378 = vmatpush2.msra.mxu0 0.0
    %1379 = vmatprep.subr.mxu0 0.0
    %1380 = vmatpush2.msra.mxu0 0.0
    %1381 = vmatprep.subr.mxu0 0.0
    %1382 = vmatpush2.msra.mxu0 0.0
    %1383 = vmatprep.subr.mxu0 0.0
    %1384 = vmatpush2.msra.mxu0 0.0
    %1385 = vmatprep.subr.mxu0 0.0
    %1386 = vmatpush2.msra.mxu0 0.0
    %1387 = vmatprep.subr.mxu0 0.0
    %1388 = vmatpush2.msra.mxu0 0.0
    %1389 = vmatprep.subr.mxu0 0.0
    %1390 = vmatpush2.msra.mxu0 0.0
    %1391 = vmatprep.subr.mxu0 0.0
    %1392 = vmatpush2.msra.mxu0 0.0
    %1393 = vmatprep.subr.mxu0 0.0
    %1394 = vmatpush2.msra.mxu0 0.0
    %1395 = vmatprep.subr.mxu0 0.0
    %1396 = vmatpush2.msra.mxu0 0.0
    %1397 = vmatprep.mubr.f32.mxu0 0.0
    %1398 = vmatmul.mubr.f32.gmra.mxu0 %v1331
    %v1399 = vpop.f32.mrf.mxu0
    %v1400 = vadd.f32 0.0, %v1399
    %v1401 = vpop.f32.mrf.mxu0
    %1402 = vdwg.mxu0
    %v1404 = vrot.slane %v1400, 2
    %v1406 = vadd.f32 %v138, %v1404
    %v1407 = vxor.u32 %v1406, 2147483648
    %v1408 = vmul.f32 %v1407, 1.442695
    %v1409 = vpow.pop %v1408
    %v1410 = vadd.f32 %v1409, 1.0
    %v1411 = vrcp.pop %v1410
    %v1412 = vmul.f32 1.0, %v1411
    %v1413 = vtanh.pop %v1406
    %v1415 = vrot.slane %v1315, 6
    %v1417 = vmul.f32 %v1412, %v1415
    %1419 = vrot.lane.b32.xlu0 %v1413, 64
    %v1420 = vpop.permute.xlu0 %1419
    %v1422 = vmul.f32 %v1412, %v1420
    %1424 = vrot.lane.b32.xlu0 %v1422, 32
    %v1425 = vpop.permute.xlu0 %1424
    %v1427 = vadd.f32 %v1417, %v1425
    %v1428 = vtanh.pop %v1427
    %1430 = vrot.lane.b32.xlu0 %v1428, 64
    %v1431 = vpop.permute.xlu0 %1430
    %v1433 = vmul.f32 %v1412, %v1431
    %1435 = vrot.lane.b32.xlu0 %v1433, 32
    %v1436 = vpop.permute.xlu0 %1435
    %vm1438 = vcmask 261126
    %1439 = vst.msk [vmem:[#allocation2] sm:$0xc0] %vm1438, %v1436
    %v1440 = vrot.slane %v1433, 6
    %1441 = vrot.lane.b32.xlu0 %v1440, 32
    %v1442 = vpop.permute.xlu0 %1441
    %v1443 = vsel %vm154, %v1442, 0
    %1445 = vmatprep.subr.mxu0 0.0
    %1446 = vmatpush1.msra.mxu0 0.0
    %1447 = vmatprep.subr.mxu0 0.0
    %1448 = vmatpush1.msra.mxu0 0.0
    %1449 = vmatprep.subr.mxu0 0.0
    %1450 = vmatpush1.msra.mxu0 0.0
    %1451 = vmatprep.subr.mxu0 0.0
    %1452 = vmatpush1.msra.mxu0 0.0
    %1453 = vmatprep.subr.mxu0 0.0
    %1454 = vmatpush1.msra.mxu0 0.0
    %1455 = vmatprep.subr.mxu0 0.0
    %1456 = vmatpush1.msra.mxu0 0.0
    %1457 = vmatprep.subr.mxu0 0.0
    %1458 = vmatpush1.msra.mxu0 0.0
    %1459 = vmatprep.subr.mxu0 0.0
    %1460 = vmatpush1.msra.mxu0 0.0
    %1461 = vmatprep.subr.mxu0 0.0
    %1462 = vmatpush1.msra.mxu0 0.0
    %1463 = vmatprep.subr.mxu0 0.0
    %1464 = vmatpush1.msra.mxu0 0.0
    %1465 = vmatprep.subr.mxu0 0.0
    %1466 = vmatpush1.msra.mxu0 0.0
    %1467 = vmatprep.subr.mxu0 0.0
    %1468 = vmatpush1.msra.mxu0 0.0
    %1469 = vmatprep.subr.mxu0 0.0
    %1470 = vmatpush1.msra.mxu0 %v153
    %1471 = vmatprep.subr.mxu0 0.0
    %1472 = vmatpush1.msra.mxu0 %v152
    %1473 = vmatprep.subr.mxu0 0.0
    %1474 = vmatpush1.msra.mxu0 %v151
    %1475 = vmatprep.subr.mxu0 0.0
    %1476 = vmatpush1.msra.mxu0 %v150
    %1477 = vmatprep.subr.mxu0 0.0
    %1478 = vmatpush2.msra.mxu0 0.0
    %1479 = vmatprep.subr.mxu0 0.0
    %1480 = vmatpush2.msra.mxu0 0.0
    %1481 = vmatprep.subr.mxu0 0.0
    %1482 = vmatpush2.msra.mxu0 0.0
    %1483 = vmatprep.subr.mxu0 0.0
    %1484 = vmatpush2.msra.mxu0 0.0
    %1485 = vmatprep.subr.mxu0 0.0
    %1486 = vmatpush2.msra.mxu0 0.0
    %1487 = vmatprep.subr.mxu0 0.0
    %1488 = vmatpush2.msra.mxu0 0.0
    %1489 = vmatprep.subr.mxu0 0.0
    %1490 = vmatpush2.msra.mxu0 0.0
    %1491 = vmatprep.subr.mxu0 0.0
    %1492 = vmatpush2.msra.mxu0 0.0
    %1493 = vmatprep.subr.mxu0 0.0
    %1494 = vmatpush2.msra.mxu0 0.0
    %1495 = vmatprep.subr.mxu0 0.0
    %1496 = vmatpush2.msra.mxu0 0.0
    %1497 = vmatprep.subr.mxu0 0.0
    %1498 = vmatpush2.msra.mxu0 0.0
    %1499 = vmatprep.subr.mxu0 0.0
    %1500 = vmatpush2.msra.mxu0 0.0
    %1501 = vmatprep.subr.mxu0 0.0
    %1502 = vmatpush2.msra.mxu0 0.0
    %1503 = vmatprep.subr.mxu0 0.0
    %1504 = vmatpush2.msra.mxu0 0.0
    %1505 = vmatprep.subr.mxu0 0.0
    %1506 = vmatpush2.msra.mxu0 0.0
    %1507 = vmatprep.subr.mxu0 0.0
    %1508 = vmatpush2.msra.mxu0 0.0
    %1509 = vmatprep.mubr.f32.mxu0 0.0
    %1510 = vmatmul.mubr.f32.gmra.mxu0 %v1443
    %v1511 = vpop.f32.mrf.mxu0
    %v1512 = vadd.f32 0.0, %v1511
    %v1513 = vpop.f32.mrf.mxu0
    %1514 = vdwg.mxu0
    %v1515 = vadd.f32 %v144, %v1512
    %v1516 = vxor.u32 %v1515, 2147483648
    %v1517 = vmul.f32 %v1516, 1.442695
    %v1518 = vpow.pop %v1517
    %v1519 = vadd.f32 %v1518, 1.0
    %v1520 = vrcp.pop %v1519
    %v1521 = vmul.f32 1.0, %v1520
    %v1522 = vtanh.pop %v1515
    %v1524 = vrot.slane %v1427, 6
    %v1526 = vmul.f32 %v1521, %v1524
    %1528 = vrot.lane.b32.xlu0 %v1522, 64
    %v1529 = vpop.permute.xlu0 %1528
    %v1531 = vmul.f32 %v1521, %v1529
    %1533 = vrot.lane.b32.xlu0 %v1531, 32
    %v1534 = vpop.permute.xlu0 %1533
    %v1536 = vadd.f32 %v1526, %v1534
    %v1537 = vtanh.pop %v1536
    %1539 = vrot.lane.b32.xlu0 %v1537, 64
    %v1540 = vpop.permute.xlu0 %1539
    %v1542 = vmul.f32 %v1521, %v1540
    %1544 = vrot.lane.b32.xlu0 %v1542, 32
    %v1545 = vpop.permute.xlu0 %1544
    %1547 = vst.msk [vmem:[#allocation2 + $0x8] sm:$0x3] %vm1105, %v1545
    %v1548 = vsel %vm154, %v1545, 0
    %1550 = vmatprep.subr.mxu0 0.0
    %1551 = vmatpush1.msra.mxu0 0.0
    %1552 = vmatprep.subr.mxu0 0.0
    %1553 = vmatpush1.msra.mxu0 0.0
    %1554 = vmatprep.subr.mxu0 0.0
    %1555 = vmatpush1.msra.mxu0 0.0
    %1556 = vmatprep.subr.mxu0 0.0
    %1557 = vmatpush1.msra.mxu0 0.0
    %1558 = vmatprep.subr.mxu0 0.0
    %1559 = vmatpush1.msra.mxu0 0.0
    %1560 = vmatprep.subr.mxu0 0.0
    %1561 = vmatpush1.msra.mxu0 0.0
    %1562 = vmatprep.subr.mxu0 0.0
    %1563 = vmatpush1.msra.mxu0 0.0
    %1564 = vmatprep.subr.mxu0 0.0
    %1565 = vmatpush1.msra.mxu0 0.0
    %1566 = vmatprep.subr.mxu0 0.0
    %1567 = vmatpush1.msra.mxu0 0.0
    %1568 = vmatprep.subr.mxu0 0.0
    %1569 = vmatpush1.msra.mxu0 0.0
    %1570 = vmatprep.subr.mxu0 0.0
    %1571 = vmatpush1.msra.mxu0 0.0
    %1572 = vmatprep.subr.mxu0 0.0
    %1573 = vmatpush1.msra.mxu0 0.0
    %1574 = vmatprep.subr.mxu0 0.0
    %1575 = vmatpush1.msra.mxu0 %v153
    %1576 = vmatprep.subr.mxu0 0.0
    %1577 = vmatpush1.msra.mxu0 %v152
    %1578 = vmatprep.subr.mxu0 0.0
    %1579 = vmatpush1.msra.mxu0 %v151
    %1580 = vmatprep.subr.mxu0 0.0
    %1581 = vmatpush1.msra.mxu0 %v150
    %1582 = vmatprep.subr.mxu0 0.0
    %1583 = vmatpush2.msra.mxu0 0.0
    %1584 = vmatprep.subr.mxu0 0.0
    %1585 = vmatpush2.msra.mxu0 0.0
    %1586 = vmatprep.subr.mxu0 0.0
    %1587 = vmatpush2.msra.mxu0 0.0
    %1588 = vmatprep.subr.mxu0 0.0
    %1589 = vmatpush2.msra.mxu0 0.0
    %1590 = vmatprep.subr.mxu0 0.0
    %1591 = vmatpush2.msra.mxu0 0.0
    %1592 = vmatprep.subr.mxu0 0.0
    %1593 = vmatpush2.msra.mxu0 0.0
    %1594 = vmatprep.subr.mxu0 0.0
    %1595 = vmatpush2.msra.mxu0 0.0
    %1596 = vmatprep.subr.mxu0 0.0
    %1597 = vmatpush2.msra.mxu0 0.0
    %1598 = vmatprep.subr.mxu0 0.0
    %1599 = vmatpush2.msra.mxu0 0.0
    %1600 = vmatprep.subr.mxu0 0.0
    %1601 = vmatpush2.msra.mxu0 0.0
    %1602 = vmatprep.subr.mxu0 0.0
    %1603 = vmatpush2.msra.mxu0 0.0
    %1604 = vmatprep.subr.mxu0 0.0
    %1605 = vmatpush2.msra.mxu0 0.0
    %1606 = vmatprep.subr.mxu0 0.0
    %1607 = vmatpush2.msra.mxu0 0.0
    %1608 = vmatprep.subr.mxu0 0.0
    %1609 = vmatpush2.msra.mxu0 0.0
    %1610 = vmatprep.subr.mxu0 0.0
    %1611 = vmatpush2.msra.mxu0 0.0
    %1612 = vmatprep.subr.mxu0 0.0
    %1613 = vmatpush2.msra.mxu0 0.0
    %1614 = vmatprep.mubr.f32.mxu0 0.0
    %1615 = vmatmul.mubr.f32.gmra.mxu0 %v1548
    %v1616 = vpop.f32.mrf.mxu0
    %v1617 = vadd.f32 0.0, %v1616
    %v1618 = vpop.f32.mrf.mxu0
    %1619 = vdwg.mxu0
    %v1621 = vrot.slane %v1617, 6
    %v1623 = vadd.f32 %v144, %v1621
    %v1624 = vxor.u32 %v1623, 2147483648
    %v1625 = vmul.f32 %v1624, 1.442695
    %v1626 = vpow.pop %v1625
    %v1627 = vadd.f32 %v1626, 1.0
    %v1628 = vrcp.pop %v1627
    %v1629 = vmul.f32 1.0, %v1628
    %v1630 = vtanh.pop %v1623
    %v1632 = vrot.slane %v1536, 6
    %v1634 = vmul.f32 %v1629, %v1632
    %1636 = vrot.lane.b32.xlu0 %v1630, 64
    %v1637 = vpop.permute.xlu0 %1636
    %v1639 = vmul.f32 %v1629, %v1637
    %1641 = vrot.lane.b32.xlu0 %v1639, 32
    %v1642 = vpop.permute.xlu0 %1641
    %v1644 = vadd.f32 %v1634, %v1642
    %v1645 = vtanh.pop %v1644
    %1647 = vrot.lane.b32.xlu0 %v1645, 64
    %v1648 = vpop.permute.xlu0 %1647
    %v1650 = vmul.f32 %v1629, %v1648
    %1652 = vrot.lane.b32.xlu0 %v1650, 32
    %v1653 = vpop.permute.xlu0 %1652
    %1655 = vst.msk [vmem:[#allocation2 + $0x8] sm:$0xc] %vm1214, %v1653
    %v1656 = vrot.slane %v1650, 2
    %1657 = vrot.lane.b32.xlu0 %v1656, 32
    %v1658 = vpop.permute.xlu0 %1657
    %v1659 = vsel %vm154, %v1658, 0
    %1661 = vmatprep.subr.mxu0 0.0
    %1662 = vmatpush1.msra.mxu0 0.0
    %1663 = vmatprep.subr.mxu0 0.0
    %1664 = vmatpush1.msra.mxu0 0.0
    %1665 = vmatprep.subr.mxu0 0.0
    %1666 = vmatpush1.msra.mxu0 0.0
    %1667 = vmatprep.subr.mxu0 0.0
    %1668 = vmatpush1.msra.mxu0 0.0
    %1669 = vmatprep.subr.mxu0 0.0
    %1670 = vmatpush1.msra.mxu0 0.0
    %1671 = vmatprep.subr.mxu0 0.0
    %1672 = vmatpush1.msra.mxu0 0.0
    %1673 = vmatprep.subr.mxu0 0.0
    %1674 = vmatpush1.msra.mxu0 0.0
    %1675 = vmatprep.subr.mxu0 0.0
    %1676 = vmatpush1.msra.mxu0 0.0
    %1677 = vmatprep.subr.mxu0 0.0
    %1678 = vmatpush1.msra.mxu0 0.0
    %1679 = vmatprep.subr.mxu0 0.0
    %1680 = vmatpush1.msra.mxu0 0.0
    %1681 = vmatprep.subr.mxu0 0.0
    %1682 = vmatpush1.msra.mxu0 0.0
    %1683 = vmatprep.subr.mxu0 0.0
    %1684 = vmatpush1.msra.mxu0 0.0
    %1685 = vmatprep.subr.mxu0 0.0
    %1686 = vmatpush1.msra.mxu0 %v153
    %1687 = vmatprep.subr.mxu0 0.0
    %1688 = vmatpush1.msra.mxu0 %v152
    %1689 = vmatprep.subr.mxu0 0.0
    %1690 = vmatpush1.msra.mxu0 %v151
    %1691 = vmatprep.subr.mxu0 0.0
    %1692 = vmatpush1.msra.mxu0 %v150
    %1693 = vmatprep.subr.mxu0 0.0
    %1694 = vmatpush2.msra.mxu0 0.0
    %1695 = vmatprep.subr.mxu0 0.0
    %1696 = vmatpush2.msra.mxu0 0.0
    %1697 = vmatprep.subr.mxu0 0.0
    %1698 = vmatpush2.msra.mxu0 0.0
    %1699 = vmatprep.subr.mxu0 0.0
    %1700 = vmatpush2.msra.mxu0 0.0
    %1701 = vmatprep.subr.mxu0 0.0
    %1702 = vmatpush2.msra.mxu0 0.0
    %1703 = vmatprep.subr.mxu0 0.0
    %1704 = vmatpush2.msra.mxu0 0.0
    %1705 = vmatprep.subr.mxu0 0.0
    %1706 = vmatpush2.msra.mxu0 0.0
    %1707 = vmatprep.subr.mxu0 0.0
    %1708 = vmatpush2.msra.mxu0 0.0
    %1709 = vmatprep.subr.mxu0 0.0
    %1710 = vmatpush2.msra.mxu0 0.0
    %1711 = vmatprep.subr.mxu0 0.0
    %1712 = vmatpush2.msra.mxu0 0.0
    %1713 = vmatprep.subr.mxu0 0.0
    %1714 = vmatpush2.msra.mxu0 0.0
    %1715 = vmatprep.subr.mxu0 0.0
    %1716 = vmatpush2.msra.mxu0 0.0
    %1717 = vmatprep.subr.mxu0 0.0
    %1718 = vmatpush2.msra.mxu0 0.0
    %1719 = vmatprep.subr.mxu0 0.0
    %1720 = vmatpush2.msra.mxu0 0.0
    %1721 = vmatprep.subr.mxu0 0.0
    %1722 = vmatpush2.msra.mxu0 0.0
    %1723 = vmatprep.subr.mxu0 0.0
    %1724 = vmatpush2.msra.mxu0 0.0
    %1725 = vmatprep.mubr.f32.mxu0 0.0
    %1726 = vmatmul.mubr.f32.gmra.mxu0 %v1659
    %v1727 = vpop.f32.mrf.mxu0
    %v1728 = vadd.f32 0.0, %v1727
    %v1729 = vpop.f32.mrf.mxu0
    %1730 = vdwg.mxu0
    %v1732 = vrot.slane %v1728, 4
    %v1734 = vadd.f32 %v144, %v1732
    %v1735 = vxor.u32 %v1734, 2147483648
    %v1736 = vmul.f32 %v1735, 1.442695
    %v1737 = vpow.pop %v1736
    %v1738 = vadd.f32 %v1737, 1.0
    %v1739 = vrcp.pop %v1738
    %v1740 = vmul.f32 1.0, %v1739
    %v1741 = vtanh.pop %v1734
    %v1743 = vrot.slane %v1644, 6
    %v1745 = vmul.f32 %v1740, %v1743
    %1747 = vrot.lane.b32.xlu0 %v1741, 64
    %v1748 = vpop.permute.xlu0 %1747
    %v1750 = vmul.f32 %v1740, %v1748
    %1752 = vrot.lane.b32.xlu0 %v1750, 32
    %v1753 = vpop.permute.xlu0 %1752
    %v1755 = vadd.f32 %v1745, %v1753
    %v1756 = vtanh.pop %v1755
    %1758 = vrot.lane.b32.xlu0 %v1756, 64
    %v1759 = vpop.permute.xlu0 %1758
    %v1761 = vmul.f32 %v1740, %v1759
    %1763 = vrot.lane.b32.xlu0 %v1761, 32
    %v1764 = vpop.permute.xlu0 %1763
    %1766 = vst.msk [vmem:[#allocation2 + $0x8] sm:$0x30] %vm1326, %v1764
    %v1767 = vrot.slane %v1761, 4
    %1768 = vrot.lane.b32.xlu0 %v1767, 32
    %v1769 = vpop.permute.xlu0 %1768
    %v1770 = vsel %vm154, %v1769, 0
    %1772 = vmatprep.subr.mxu0 0.0
    %1773 = vmatpush1.msra.mxu0 0.0
    %1774 = vmatprep.subr.mxu0 0.0
    %1775 = vmatpush1.msra.mxu0 0.0
    %1776 = vmatprep.subr.mxu0 0.0
    %1777 = vmatpush1.msra.mxu0 0.0
    %1778 = vmatprep.subr.mxu0 0.0
    %1779 = vmatpush1.msra.mxu0 0.0
    %1780 = vmatprep.subr.mxu0 0.0
    %1781 = vmatpush1.msra.mxu0 0.0
    %1782 = vmatprep.subr.mxu0 0.0
    %1783 = vmatpush1.msra.mxu0 0.0
    %1784 = vmatprep.subr.mxu0 0.0
    %1785 = vmatpush1.msra.mxu0 0.0
    %1786 = vmatprep.subr.mxu0 0.0
    %1787 = vmatpush1.msra.mxu0 0.0
    %1788 = vmatprep.subr.mxu0 0.0
    %1789 = vmatpush1.msra.mxu0 0.0
    %1790 = vmatprep.subr.mxu0 0.0
    %1791 = vmatpush1.msra.mxu0 0.0
    %1792 = vmatprep.subr.mxu0 0.0
    %1793 = vmatpush1.msra.mxu0 0.0
    %1794 = vmatprep.subr.mxu0 0.0
    %1795 = vmatpush1.msra.mxu0 0.0
    %1796 = vmatprep.subr.mxu0 0.0
    %1797 = vmatpush1.msra.mxu0 %v153
    %1798 = vmatprep.subr.mxu0 0.0
    %1799 = vmatpush1.msra.mxu0 %v152
    %1800 = vmatprep.subr.mxu0 0.0
    %1801 = vmatpush1.msra.mxu0 %v151
    %1802 = vmatprep.subr.mxu0 0.0
    %1803 = vmatpush1.msra.mxu0 %v150
    %1804 = vmatprep.subr.mxu0 0.0
    %1805 = vmatpush2.msra.mxu0 0.0
    %1806 = vmatprep.subr.mxu0 0.0
    %1807 = vmatpush2.msra.mxu0 0.0
    %1808 = vmatprep.subr.mxu0 0.0
    %1809 = vmatpush2.msra.mxu0 0.0
    %1810 = vmatprep.subr.mxu0 0.0
    %1811 = vmatpush2.msra.mxu0 0.0
    %1812 = vmatprep.subr.mxu0 0.0
    %1813 = vmatpush2.msra.mxu0 0.0
    %1814 = vmatprep.subr.mxu0 0.0
    %1815 = vmatpush2.msra.mxu0 0.0
    %1816 = vmatprep.subr.mxu0 0.0
    %1817 = vmatpush2.msra.mxu0 0.0
    %1818 = vmatprep.subr.mxu0 0.0
    %1819 = vmatpush2.msra.mxu0 0.0
    %1820 = vmatprep.subr.mxu0 0.0
    %1821 = vmatpush2.msra.mxu0 0.0
    %1822 = vmatprep.subr.mxu0 0.0
    %1823 = vmatpush2.msra.mxu0 0.0
    %1824 = vmatprep.subr.mxu0 0.0
    %1825 = vmatpush2.msra.mxu0 0.0
    %1826 = vmatprep.subr.mxu0 0.0
    %1827 = vmatpush2.msra.mxu0 0.0
    %1828 = vmatprep.subr.mxu0 0.0
    %1829 = vmatpush2.msra.mxu0 0.0
    %1830 = vmatprep.subr.mxu0 0.0
    %1831 = vmatpush2.msra.mxu0 0.0
    %1832 = vmatprep.subr.mxu0 0.0
    %1833 = vmatpush2.msra.mxu0 0.0
    %1834 = vmatprep.subr.mxu0 0.0
    %1835 = vmatpush2.msra.mxu0 0.0
    %1836 = vmatprep.mubr.f32.mxu0 0.0
    %1837 = vmatmul.mubr.f32.gmra.mxu0 %v1770
    %v1838 = vpop.f32.mrf.mxu0
    %v1839 = vadd.f32 0.0, %v1838
    %v1840 = vpop.f32.mrf.mxu0
    %1841 = vdwg.mxu0
    %v1843 = vrot.slane %v1839, 2
    %v1845 = vadd.f32 %v144, %v1843
    %v1846 = vxor.u32 %v1845, 2147483648
    %v1847 = vmul.f32 %v1846, 1.442695
    %v1848 = vpow.pop %v1847
    %v1849 = vadd.f32 %v1848, 1.0
    %v1850 = vrcp.pop %v1849
    %v1851 = vmul.f32 1.0, %v1850
    %v1852 = vtanh.pop %v1845
    %v1854 = vrot.slane %v1755, 6
    %v1856 = vmul.f32 %v1851, %v1854
    %1858 = vrot.lane.b32.xlu0 %v1852, 64
    %v1859 = vpop.permute.xlu0 %1858
    %v1861 = vmul.f32 %v1851, %v1859
    %1863 = vrot.lane.b32.xlu0 %v1861, 32
    %v1864 = vpop.permute.xlu0 %1863
    %v1866 = vadd.f32 %v1856, %v1864
    %v1867 = vtanh.pop %v1866
    %1869 = vrot.lane.b32.xlu0 %v1867, 64
    %v1870 = vpop.permute.xlu0 %1869
    %v1872 = vmul.f32 %v1851, %v1870
    %1874 = vrot.lane.b32.xlu0 %v1872, 32
    %v1875 = vpop.permute.xlu0 %1874
    %1877 = vst.msk [vmem:[#allocation2 + $0x8] sm:$0xc0] %vm1438, %v1875
    %v1878 = vld [vmem:[#allocation2] sm:$0xff]
    %v1879 = vld [vmem:[#allocation2 + $0x8] sm:$0xff]
    %v1880 = vld [vmem:[%s5] sm:$0xff]
    %v1881 = vld [vmem:[%s5 + $0x8] sm:$0xff]
    %v1882 = vld [vmem:[%s5 + $0x10] sm:$0xff]
    %v1883 = vld [vmem:[%s5 + $0x18] sm:$0xff]
    %v1884 = vld [vmem:[%s6] sm:$0x1]
    %v1886 = vlaneseq
    %v1887 = vshrl.u32 %v1886, 7
    %v1888 = vsub.s32 0, %v1887
    %v1889 = vrot.slane %v1884, %v1888
    %v1892 = vsel %vm154, %v1878, 0
    %v1895 = vsel %vm154, %v1879, 0
    %1897 = vmatprep.subr.mxu0 0.0
    %1898 = vmatpush1.msra.mxu0 0.0
    %1899 = vmatprep.subr.mxu0 0.0
    %1900 = vmatpush1.msra.mxu0 0.0
    %1901 = vmatprep.subr.mxu0 0.0
    %1902 = vmatpush1.msra.mxu0 0.0
    %1903 = vmatprep.subr.mxu0 0.0
    %1904 = vmatpush1.msra.mxu0 0.0
    %1905 = vmatprep.subr.mxu0 0.0
    %1906 = vmatpush1.msra.mxu0 0.0
    %1907 = vmatprep.subr.mxu0 0.0
    %1908 = vmatpush1.msra.mxu0 0.0
    %1909 = vmatprep.subr.mxu0 0.0
    %1910 = vmatpush1.msra.mxu0 0.0
    %1911 = vmatprep.subr.mxu0 0.0
    %1912 = vmatpush1.msra.mxu0 0.0
    %1913 = vmatprep.subr.mxu0 0.0
    %1914 = vmatpush1.msra.mxu0 0.0
    %1915 = vmatprep.subr.mxu0 0.0
    %1916 = vmatpush1.msra.mxu0 0.0
    %1917 = vmatprep.subr.mxu0 0.0
    %1918 = vmatpush1.msra.mxu0 0.0
    %1919 = vmatprep.subr.mxu0 0.0
    %1920 = vmatpush1.msra.mxu0 0.0
    %1921 = vmatprep.subr.mxu0 0.0
    %1922 = vmatpush1.msra.mxu0 %v1883
    %1923 = vmatprep.subr.mxu0 0.0
    %1924 = vmatpush1.msra.mxu0 %v1882
    %1925 = vmatprep.subr.mxu0 0.0
    %1926 = vmatpush1.msra.mxu0 %v1881
    %1927 = vmatprep.subr.mxu0 0.0
    %1928 = vmatpush1.msra.mxu0 %v1880
    %1929 = vmatprep.subr.mxu0 0.0
    %1930 = vmatpush2.msra.mxu0 0.0
    %1931 = vmatprep.subr.mxu0 0.0
    %1932 = vmatpush2.msra.mxu0 0.0
    %1933 = vmatprep.subr.mxu0 0.0
    %1934 = vmatpush2.msra.mxu0 0.0
    %1935 = vmatprep.subr.mxu0 0.0
    %1936 = vmatpush2.msra.mxu0 0.0
    %1937 = vmatprep.subr.mxu0 0.0
    %1938 = vmatpush2.msra.mxu0 0.0
    %1939 = vmatprep.subr.mxu0 0.0
    %1940 = vmatpush2.msra.mxu0 0.0
    %1941 = vmatprep.subr.mxu0 0.0
    %1942 = vmatpush2.msra.mxu0 0.0
    %1943 = vmatprep.subr.mxu0 0.0
    %1944 = vmatpush2.msra.mxu0 0.0
    %1945 = vmatprep.subr.mxu0 0.0
    %1946 = vmatpush2.msra.mxu0 0.0
    %1947 = vmatprep.subr.mxu0 0.0
    %1948 = vmatpush2.msra.mxu0 0.0
    %1949 = vmatprep.subr.mxu0 0.0
    %1950 = vmatpush2.msra.mxu0 0.0
    %1951 = vmatprep.subr.mxu0 0.0
    %1952 = vmatpush2.msra.mxu0 0.0
    %1953 = vmatprep.subr.mxu0 0.0
    %1954 = vmatpush2.msra.mxu0 0.0
    %1955 = vmatprep.subr.mxu0 0.0
    %1956 = vmatpush2.msra.mxu0 0.0
    %1957 = vmatprep.subr.mxu0 0.0
    %1958 = vmatpush2.msra.mxu0 0.0
    %1959 = vmatprep.subr.mxu0 0.0
    %1960 = vmatpush2.msra.mxu0 0.0
    %1961 = vmatprep.mubr.f32.mxu0 0.0
    %1962 = vmatmul.mubr.f32.gmra.mxu0 %v1892
    %v1963 = vpop.f32.mrf.mxu0
    %v1964 = vadd.f32 %v1889, %v1963
    %v1965 = vpop.f32.mrf.mxu0
    %1966 = vmatprep.mubr.f32.mxu0 0.0
    %1967 = vmatmul.mubr.f32.gmra.mxu0 %v1895
    %v1968 = vpop.f32.mrf.mxu0
    %v1969 = vadd.f32 %v1889, %v1968
    %v1970 = vpop.f32.mrf.mxu0
    %1971 = vdwg.mxu0
    %1972 = vst.msk [vmem:[%s7] sm:$0xff] %vm57, %v1964
    %1973 = vst.msk [vmem:[%s7 + $0x8] sm:$0xff] %vm57, %v1969
    // Predicated region
    $region34: #{tpu_custom_call.1} parent=1 // pred_check
      _
    $region35: #{tpu_custom_call.1} parent=1 // pred_check_branch
      %1975 = sbr.rel (0) target = $region37
    $region36: #{tpu_custom_call.1} parent=1 // pred_region
      _
    $region37: #{tpu_custom_call.1} parent=1 // pred_fallthru
      _
    // Predicated region
    $region38: #{tpu_custom_call.1} parent=1 // pred_check
      _
    $region39: #{tpu_custom_call.1} parent=1 // pred_check_branch
      %1977 = sbr.rel (0) target = $region41
    $region40: #{tpu_custom_call.1} parent=1 // pred_region
      _
    $region41: #{tpu_custom_call.1} parent=1 // pred_fallthru
      _
    %1978 = vsyncpa [#allocation4], 1

</llo_original>
